<compile_context>
chip_gen: v5e
topology: v5e:2x2
jax: 0.10.0
libtpu: 0.0.40
codegen_flags: <defaults>
</compile_context>

<pallas_src>
import functools

import jax
import jax.numpy as jnp
from jax.experimental import pallas as pl
from jax.experimental.pallas import tpu as pltpu


# ------------------------------------------------------------------ kernel helpers

def _lstm_cell(x, h_prev, c_prev, wih_ref, whh_ref, b_ref, H):
    """One LSTM cell update. x:(Bp,Din) h/c:(Bp,H) wih:(Din,4H) whh:(H,4H) b:(1,4H)."""
    gates = (jnp.dot(x, wih_ref[...], preferred_element_type=jnp.float32)
             + jnp.dot(h_prev, whh_ref[...], preferred_element_type=jnp.float32)
             + b_ref[...])
    i = jax.nn.sigmoid(gates[:, 0 * H:1 * H])
    f = jax.nn.sigmoid(gates[:, 1 * H:2 * H])
    g = jnp.tanh(gates[:, 2 * H:3 * H])
    o = jax.nn.sigmoid(gates[:, 3 * H:4 * H])
    c_new = f * c_prev + i * g
    h_new = o * jnp.tanh(c_new)
    return h_new, c_new


# ------------------------------------------------------------------ fused kernels

def _encoder_kernel(L, H, *refs):
    """Fused encoder: grid=(S,). Processes one source timestep per grid step.

    refs: emb(1,Bp,E) | wih[L] | whh[L] | b[L] | h_out(L,Bp,H) c_out(L,Bp,H)
          | scratch h_sc(L,Bp,H) c_sc(L,Bp,H)
    """
    emb_ref = refs[0]
    wih = refs[1:1 + L]
    whh = refs[1 + L:1 + 2 * L]
    b = refs[1 + 2 * L:1 + 3 * L]
    h_out_ref = refs[1 + 3 * L]
    c_out_ref = refs[2 + 3 * L]
    h_sc = refs[3 + 3 * L]
    c_sc = refs[4 + 3 * L]

    t = pl.program_id(0)

    @pl.when(t == 0)
    def _():
        h_sc[...] = jnp.zeros_like(h_sc)
        c_sc[...] = jnp.zeros_like(c_sc)

    x = emb_ref[0]                       # (Bp, E)
    for l in range(L):                   # static unroll over layers
        h_new, c_new = _lstm_cell(x, h_sc[l], c_sc[l], wih[l], whh[l], b[l], H)
        h_sc[l] = h_new
        c_sc[l] = c_new
        x = h_new

    @pl.when(t == pl.num_programs(0) - 1)
    def _():
        h_out_ref[...] = h_sc[...]
        c_out_ref[...] = c_sc[...]


def _decoder_kernel(L, H, *refs):
    """Fused decoder recurrence: grid=(T-1,). Emits top-layer hidden per step.

    refs: emb(1,Bp,E) h0(L,Bp,H) c0(L,Bp,H) | wih[L] | whh[L] | b[L]
          | h_top_out(1,Bp,H) | scratch h_sc(L,Bp,H) c_sc(L,Bp,H)
    """
    emb_ref = refs[0]
    h0_ref = refs[1]
    c0_ref = refs[2]
    wih = refs[3:3 + L]
    whh = refs[3 + L:3 + 2 * L]
    b = refs[3 + 2 * L:3 + 3 * L]
    htop_ref = refs[3 + 3 * L]
    h_sc = refs[4 + 3 * L]
    c_sc = refs[5 + 3 * L]

    t = pl.program_id(0)

    @pl.when(t == 0)
    def _():
        h_sc[...] = h0_ref[...]
        c_sc[...] = c0_ref[...]

    x = emb_ref[0]                       # (Bp, E)
    for l in range(L):
        h_new, c_new = _lstm_cell(x, h_sc[l], c_sc[l], wih[l], whh[l], b[l], H)
        h_sc[l] = h_new
        c_sc[l] = c_new
        x = h_new

    htop_ref[0] = x                      # (Bp, H) -> slab[t]


def _fc_kernel(x_ref, w_ref, b_ref, o_ref):
    """o = x @ W + b.  x:((T-1)*Bp, H)  W:(H, Vp)  b:(1, Vp)  o:((T-1)*Bp, Vp)."""
    o_ref[...] = (jnp.dot(x_ref[...], w_ref[...],
                          preferred_element_type=jnp.float32) + b_ref[...])


# ------------------------------------------------------------------ pallas wrappers

_VMEM = pl.BlockSpec(memory_space=pltpu.MemorySpace.VMEM)
_ARB = pltpu.CompilerParams(dimension_semantics=("arbitrary",))


def _const2d_spec():
    # Full-array block whose index is constant across the grid -> DMA'd once, resident.
    return pl.BlockSpec((None))  # placeholder (unused; see usages below)


def encoder_forward(params, emb_slab, hidden_size, rnn_units):
    """emb_slab: (S, Bp, E) f32 -> (hidden, cell), each (rnn_units, Bp, H)."""
    S, Bp, E = emb_slab.shape
    L, H = rnn_units, hidden_size

    weight_args = ([params["enc_lstm"][l]["wih"] for l in range(L)]
                   + [params["enc_lstm"][l]["whh"] for l in range(L)]
                   + [params["enc_lstm"][l]["b"] for l in range(L)])

    in_specs = [pl.BlockSpec((1, Bp, E), lambda t: (t, 0, 0))]
    in_specs += [pl.BlockSpec(w.shape, lambda t: (0, 0)) for w in weight_args]

    out_specs = (pl.BlockSpec((L, Bp, H), lambda t: (0, 0, 0)),
                 pl.BlockSpec((L, Bp, H), lambda t: (0, 0, 0)))

    return pl.pallas_call(
        functools.partial(_encoder_kernel, L, H),
        grid=(S,),
        in_specs=in_specs,
        out_specs=out_specs,
        out_shape=(jax.ShapeDtypeStruct((L, Bp, H), jnp.float32),
                   jax.ShapeDtypeStruct((L, Bp, H), jnp.float32)),
        scratch_shapes=[pltpu.VMEM((L, Bp, H), jnp.float32),
                        pltpu.VMEM((L, Bp, H), jnp.float32)],
        compiler_params=_ARB,
    )(emb_slab, *weight_args)


def decoder_forward(params, emb_slab, hidden, cell, hidden_size, rnn_units):
    """emb_slab: (T-1, Bp, E); hidden/cell: (L, Bp, H). Returns h_top slab (T-1, Bp, H)."""
    Tm1, Bp, E = emb_slab.shape
    L, H = rnn_units, hidden_size

    weight_args = ([params["dec_lstm"][l]["wih"] for l in range(L)]
                   + [params["dec_lstm"][l]["whh"] for l in range(L)]
                   + [params["dec_lstm"][l]["b"] for l in range(L)])

    in_specs = [pl.BlockSpec((1, Bp, E), lambda t: (t, 0, 0)),
                pl.BlockSpec((L, Bp, H), lambda t: (0, 0, 0)),
                pl.BlockSpec((L, Bp, H), lambda t: (0, 0, 0))]
    in_specs += [pl.BlockSpec(w.shape, lambda t: (0, 0)) for w in weight_args]

    out_specs = pl.BlockSpec((1, Bp, H), lambda t: (t, 0, 0))

    return pl.pallas_call(
        functools.partial(_decoder_kernel, L, H),
        grid=(Tm1,),
        in_specs=in_specs,
        out_specs=out_specs,
        out_shape=jax.ShapeDtypeStruct((Tm1, Bp, H), jnp.float32),
        scratch_shapes=[pltpu.VMEM((L, Bp, H), jnp.float32),
                        pltpu.VMEM((L, Bp, H), jnp.float32)],
        compiler_params=_ARB,
    )(emb_slab, hidden, cell, *weight_args)


def fc_forward(x, w, b):
    """x: (N, H)  w: (H, Vp)  b: (1, Vp) -> (N, Vp). Single launch, lane-dense output."""
    N = x.shape[0]
    Vp = w.shape[1]
    return pl.pallas_call(
        _fc_kernel,
        out_shape=jax.ShapeDtypeStruct((N, Vp), jnp.float32),
        in_specs=[_VMEM] * 3,
        out_specs=_VMEM,
    )(x, w, b)


# ------------------------------------------------------------------ model

def _round_up(x, m):
    return ((x + m - 1) // m) * m


def init_seq2seq_params(key, input_vocab, output_vocab, enc_emb_dim, dec_emb_dim,
                        hidden_size, rnn_units):
    """Deterministic init mirroring Seq2seq.init_weights: weights ~ N(0, 0.01), biases 0.

    fc weights are stored lane-padded to a multiple of 128 (extra columns are zero and
    sliced away in the wrapper)."""
    def nrm(k, shape):
        return 0.01 * jax.random.normal(k, shape, dtype=jnp.float32)

    Vp = _round_up(output_vocab, 128)
    keys = jax.random.split(key, 8)
    fc_w = jnp.zeros((hidden_size, Vp), jnp.float32)
    fc_w = fc_w.at[:, :output_vocab].set(nrm(keys[2], (hidden_size, output_vocab)))
    params = {
        "enc_emb": nrm(keys[0], (input_vocab, enc_emb_dim)),
        "dec_emb": nrm(keys[1], (output_vocab, dec_emb_dim)),
        "fc_w": fc_w,                                           # (H, Vp) pre-transposed
        "fc_b": jnp.zeros((1, Vp), dtype=jnp.float32),
        "enc_lstm": [],
        "dec_lstm": [],
    }
    k_enc = jax.random.split(keys[3], rnn_units * 2)
    k_dec = jax.random.split(keys[4], rnn_units * 2)
    for layer in range(rnn_units):
        din_e = enc_emb_dim if layer == 0 else hidden_size
        din_d = dec_emb_dim if layer == 0 else hidden_size
        params["enc_lstm"].append({
            "wih": nrm(k_enc[2 * layer], (din_e, 4 * hidden_size)),
            "whh": nrm(k_enc[2 * layer + 1], (hidden_size, 4 * hidden_size)),
            # combined bias b_ih + b_hh (both zero at init; sum real biases if loading
            # PyTorch weights)
            "b": jnp.zeros((1, 4 * hidden_size), dtype=jnp.float32),
        })
        params["dec_lstm"].append({
            "wih": nrm(k_dec[2 * layer], (din_d, 4 * hidden_size)),
            "whh": nrm(k_dec[2 * layer + 1], (hidden_size, 4 * hidden_size)),
            "b": jnp.zeros((1, 4 * hidden_size), dtype=jnp.float32),
        })
    return params


@functools.partial(jax.jit, static_argnames=("hidden_size", "rnn_units", "output_vocab"))
def seq2seq_forward(params, src, trg, *, hidden_size, rnn_units, output_vocab):
    """Mirrors Seq2seq.forward:
       outputs: (trg_len, batch, trg_vocab); outputs[0] stays zero;
       teacher forcing applied deterministically (see TODO at top)."""
    B, S = src.shape
    _, T = trg.shape
    Bp = _round_up(max(B, 8), 8)           # sublane-full batch

    # ---- encoder: embedding lookup (glue) -> (S, Bp, E) slab, fused recurrence
    enc_emb = jnp.take(params["enc_emb"], jnp.transpose(src, (1, 0)), axis=0)  # (S,B,E)
    enc_emb = jnp.pad(enc_emb, ((0, 0), (0, Bp - B), (0, 0)))
    hidden, cell = encoder_forward(params, enc_emb, hidden_size, rnn_units)    # (L,Bp,H)

    # ---- decoder: precompute all teacher-forced input embeddings -> (T-1, Bp, E) slab
    dec_tokens = jnp.transpose(trg[:, :T - 1], (1, 0))                         # (T-1,B)
    dec_emb = jnp.take(params["dec_emb"], dec_tokens, axis=0)                  # (T-1,B,E)
    dec_emb = jnp.pad(dec_emb, ((0, 0), (0, Bp - B), (0, 0)))
    h_top = decoder_forward(params, dec_emb, hidden, cell,
                            hidden_size, rnn_units)                            # (T-1,Bp,H)

    # ---- output Linear hoisted out of the recurrence: one batched MXU matmul
    logits = fc_forward(h_top.reshape((T - 1) * Bp, hidden_size),
                        params["fc_w"], params["fc_b"])                        # (N, Vp)
    Vp = params["fc_w"].shape[1]
    logits = logits.reshape(T - 1, Bp, Vp)[:, :B, :output_vocab]               # unpad

    outputs = jnp.concatenate(
        [jnp.zeros((1, B, output_vocab), jnp.float32), logits], axis=0)        # (T,B,V)
    return outputs


# ------------------------------------------------------------------ main

if __name__ == "__main__":
    INPUT_VOCAB = 50
    OUTPUT_VOCAB = 60
    ENC_EMB = 16
    DEC_EMB = 16
    HIDDEN = 32
    RNN_UNITS = 2
    BATCH = 4
    SRC_LEN = 8
    TRG_LEN = 8

    key = jax.random.PRNGKey(0)
    k_params, k_src, k_trg = jax.random.split(key, 3)

    params = init_seq2seq_params(k_params, INPUT_VOCAB, OUTPUT_VOCAB,
                                 ENC_EMB, DEC_EMB, HIDDEN, RNN_UNITS)

    src = jax.random.randint(k_src, (BATCH, SRC_LEN), 0, INPUT_VOCAB, dtype=jnp.int32)
    trg = jax.random.randint(k_trg, (BATCH, TRG_LEN), 0, OUTPUT_VOCAB, dtype=jnp.int32)

    out = seq2seq_forward(params, src, trg,
                          hidden_size=HIDDEN, rnn_units=RNN_UNITS,
                          output_vocab=OUTPUT_VOCAB)
    out = jax.block_until_ready(out)

    assert out.shape == (TRG_LEN, BATCH, OUTPUT_VOCAB)
    assert bool(jnp.all(out[0] == 0.0))
    assert bool(jnp.all(jnp.isfinite(out)))
    print("KERNEL_OK")
</pallas_src>

<mosaic_0001>
module attributes {stable_mosaic.version = 11 : i64} {
  func.func @_encoder_kernel(%arg0: i32, %arg1: memref<1x8x16xf32, #tpu.memory_space<vmem>>, %arg2: memref<16x128xf32, #tpu.memory_space<vmem>>, %arg3: memref<32x128xf32, #tpu.memory_space<vmem>>, %arg4: memref<32x128xf32, #tpu.memory_space<vmem>>, %arg5: memref<32x128xf32, #tpu.memory_space<vmem>>, %arg6: memref<1x128xf32, #tpu.memory_space<vmem>>, %arg7: memref<1x128xf32, #tpu.memory_space<vmem>>, %arg8: memref<2x8x32xf32, #tpu.memory_space<vmem>>, %arg9: memref<2x8x32xf32, #tpu.memory_space<vmem>>, %arg10: memref<2x8x32xf32, #tpu.memory_space<vmem>>, %arg11: memref<2x8x32xf32, #tpu.memory_space<vmem>>) attributes {dimension_semantics = [#tpu.dimension_semantics<arbitrary>], iteration_bounds = array<i64: 8>, scalar_prefetch = 0 : i64, scratch_operands = 2 : i64, tpu.core_type = #tpu.core_type<tc>, window_params = [{transform_indices = @transform_0, window_bounds = array<i64: 1, 8, 16>}, {pipeline_mode = #tpu.pipeline_mode<synchronous>, transform_indices = @transform_1, window_bounds = array<i64: 16, 128>}, {pipeline_mode = #tpu.pipeline_mode<synchronous>, transform_indices = @transform_2, window_bounds = array<i64: 32, 128>}, {pipeline_mode = #tpu.pipeline_mode<synchronous>, transform_indices = @transform_3, window_bounds = array<i64: 32, 128>}, {pipeline_mode = #tpu.pipeline_mode<synchronous>, transform_indices = @transform_4, window_bounds = array<i64: 32, 128>}, {pipeline_mode = #tpu.pipeline_mode<synchronous>, transform_indices = @transform_5, window_bounds = array<i64: 1, 128>}, {pipeline_mode = #tpu.pipeline_mode<synchronous>, transform_indices = @transform_6, window_bounds = array<i64: 1, 128>}, {pipeline_mode = #tpu.pipeline_mode<synchronous>, transform_indices = @transform_7, window_bounds = array<i64: 2, 8, 32>}, {pipeline_mode = #tpu.pipeline_mode<synchronous>, transform_indices = @transform_8, window_bounds = array<i64: 2, 8, 32>}]} {
    %c0_i32 = arith.constant 0 : i32
    %0 = arith.cmpi eq, %arg0, %c0_i32 : i32
    %1 = arith.extui %0 : i1 to i32
    %c0_i32_0 = arith.constant 0 : i32
    %2 = arith.cmpi ne, %1, %c0_i32_0 : i32
    scf.if %2 {
      %cst_48 = arith.constant 0.000000e+00 : f32
      %94 = vector.broadcast %cst_48 : f32 to vector<2x8x32xf32>
      %c0_49 = arith.constant 0 : index
      %c0_50 = arith.constant 0 : index
      %c0_51 = arith.constant 0 : index
      %95 = vector.load %arg10[%c0_49, %c0_50, %c0_51] : memref<2x8x32xf32, #tpu.memory_space<vmem>>, vector<2x8x32xf32>
      tpu.vector_store %arg10[%c0_49, %c0_50, %c0_51], %94 {strides = array<i32>} : memref<2x8x32xf32, #tpu.memory_space<vmem>>, vector<2x8x32xf32>,
      %cst_52 = arith.constant 0.000000e+00 : f32
      %96 = vector.broadcast %cst_52 : f32 to vector<2x8x32xf32>
      %c0_53 = arith.constant 0 : index
      %c0_54 = arith.constant 0 : index
      %c0_55 = arith.constant 0 : index
      %97 = vector.load %arg11[%c0_53, %c0_54, %c0_55] : memref<2x8x32xf32, #tpu.memory_space<vmem>>, vector<2x8x32xf32>
      tpu.vector_store %arg11[%c0_53, %c0_54, %c0_55], %96 {strides = array<i32>} : memref<2x8x32xf32, #tpu.memory_space<vmem>>, vector<2x8x32xf32>,
    } else {
    }
    %c0 = arith.constant 0 : index
    %c0_1 = arith.constant 0 : index
    %c0_2 = arith.constant 0 : index
    %3 = vector.load %arg1[%c0, %c0_1, %c0_2] : memref<1x8x16xf32, #tpu.memory_space<vmem>>, vector<1x8x16xf32>
    %4 = vector.shape_cast %3 : vector<1x8x16xf32> to vector<8x16xf32>
    %c0_3 = arith.constant 0 : index
    %c0_4 = arith.constant 0 : index
    %c0_5 = arith.constant 0 : index
    %5 = vector.load %arg10[%c0_3, %c0_4, %c0_5] : memref<2x8x32xf32, #tpu.memory_space<vmem>>, vector<1x8x32xf32>
    %6 = vector.shape_cast %5 : vector<1x8x32xf32> to vector<8x32xf32>
    %c0_6 = arith.constant 0 : index
    %c0_7 = arith.constant 0 : index
    %c0_8 = arith.constant 0 : index
    %7 = vector.load %arg11[%c0_6, %c0_7, %c0_8] : memref<2x8x32xf32, #tpu.memory_space<vmem>>, vector<1x8x32xf32>
    %8 = vector.shape_cast %7 : vector<1x8x32xf32> to vector<8x32xf32>
    %c0_9 = arith.constant 0 : index
    %c0_10 = arith.constant 0 : index
    %9 = vector.load %arg2[%c0_9, %c0_10] : memref<16x128xf32, #tpu.memory_space<vmem>>, vector<16x128xf32>
    %cst = arith.constant dense<0.000000e+00> : vector<8x128xf32>
    %10 = tpu.matmul %4, %9, %cst {dimension_numbers = #tpu.dot_dimension_numbers<[1], [0], [0], [1], [0, 0, 1, 1], [], []>} : vector<8x16xf32>, vector<16x128xf32>, vector<8x128xf32> -> vector<8x128xf32>
    %c0_11 = arith.constant 0 : index
    %c0_12 = arith.constant 0 : index
    %11 = vector.load %arg4[%c0_11, %c0_12] : memref<32x128xf32, #tpu.memory_space<vmem>>, vector<32x128xf32>
    %cst_13 = arith.constant dense<0.000000e+00> : vector<8x128xf32>
    %12 = tpu.matmul %6, %11, %cst_13 {dimension_numbers = #tpu.dot_dimension_numbers<[1], [0], [0], [1], [0, 0, 1, 1], [], []>} : vector<8x32xf32>, vector<32x128xf32>, vector<8x128xf32> -> vector<8x128xf32>
    %13 = arith.addf %10, %12 : vector<8x128xf32>
    %c0_14 = arith.constant 0 : index
    %c0_15 = arith.constant 0 : index
    %14 = vector.load %arg6[%c0_14, %c0_15] : memref<1x128xf32, #tpu.memory_space<vmem>>, vector<1x128xf32>
    %15 = vector.broadcast %14 : vector<1x128xf32> to vector<8x128xf32>
    %16 = arith.addf %13, %15 : vector<8x128xf32>
    %17 = vector.extract_strided_slice %16 {offsets = [0, 0], sizes = [8, 32], strides = [1, 1]} : vector<8x128xf32> to vector<8x32xf32>
    %18 = arith.negf %17 : vector<8x32xf32>
    %19 = math.exp %18 : vector<8x32xf32>
    %cst_16 = arith.constant 1.000000e+00 : f32
    %20 = vector.broadcast %cst_16 : f32 to vector<8x32xf32>
    %21 = arith.addf %20, %19 : vector<8x32xf32>
    %22 = arith.divf %20, %21 : vector<8x32xf32>
    %23 = vector.extract_strided_slice %16 {offsets = [0, 32], sizes = [8, 32], strides = [1, 1]} : vector<8x128xf32> to vector<8x32xf32>
    %24 = arith.negf %23 : vector<8x32xf32>
    %25 = math.exp %24 : vector<8x32xf32>
    %cst_17 = arith.constant 1.000000e+00 : f32
    %26 = vector.broadcast %cst_17 : f32 to vector<8x32xf32>
    %27 = arith.addf %26, %25 : vector<8x32xf32>
    %28 = arith.divf %26, %27 : vector<8x32xf32>
    %29 = vector.extract_strided_slice %16 {offsets = [0, 64], sizes = [8, 32], strides = [1, 1]} : vector<8x128xf32> to vector<8x32xf32>
    %30 = math.tanh %29 : vector<8x32xf32>
    %31 = vector.extract_strided_slice %16 {offsets = [0, 96], sizes = [8, 32], strides = [1, 1]} : vector<8x128xf32> to vector<8x32xf32>
    %32 = arith.negf %31 : vector<8x32xf32>
    %33 = math.exp %32 : vector<8x32xf32>
    %cst_18 = arith.constant 1.000000e+00 : f32
    %34 = vector.broadcast %cst_18 : f32 to vector<8x32xf32>
    %35 = arith.addf %34, %33 : vector<8x32xf32>
    %36 = arith.divf %34, %35 : vector<8x32xf32>
    %37 = arith.mulf %28, %8 : vector<8x32xf32>
    %38 = arith.mulf %22, %30 : vector<8x32xf32>
    %39 = arith.addf %37, %38 : vector<8x32xf32>
    %40 = math.tanh %39 : vector<8x32xf32>
    %41 = arith.mulf %36, %40 : vector<8x32xf32>
    %c0_19 = arith.constant 0 : index
    %c0_20 = arith.constant 0 : index
    %c0_21 = arith.constant 0 : index
    %42 = vector.load %arg10[%c0_19, %c0_20, %c0_21] : memref<2x8x32xf32, #tpu.memory_space<vmem>>, vector<1x8x32xf32>
    %43 = vector.shape_cast %42 : vector<1x8x32xf32> to vector<8x32xf32>
    %44 = vector.shape_cast %41 : vector<8x32xf32> to vector<1x8x32xf32>
    tpu.vector_store %arg10[%c0_19, %c0_20, %c0_21], %44 {strides = array<i32>} : memref<2x8x32xf32, #tpu.memory_space<vmem>>, vector<1x8x32xf32>,
    %c0_22 = arith.constant 0 : index
    %c0_23 = arith.constant 0 : index
    %c0_24 = arith.constant 0 : index
    %45 = vector.load %arg11[%c0_22, %c0_23, %c0_24] : memref<2x8x32xf32, #tpu.memory_space<vmem>>, vector<1x8x32xf32>
    %46 = vector.shape_cast %45 : vector<1x8x32xf32> to vector<8x32xf32>
    %47 = vector.shape_cast %39 : vector<8x32xf32> to vector<1x8x32xf32>
    tpu.vector_store %arg11[%c0_22, %c0_23, %c0_24], %47 {strides = array<i32>} : memref<2x8x32xf32, #tpu.memory_space<vmem>>, vector<1x8x32xf32>,
    %c1 = arith.constant 1 : index
    %c0_25 = arith.constant 0 : index
    %c0_26 = arith.constant 0 : index
    %48 = vector.load %arg10[%c1, %c0_25, %c0_26] : memref<2x8x32xf32, #tpu.memory_space<vmem>>, vector<1x8x32xf32>
    %49 = vector.shape_cast %48 : vector<1x8x32xf32> to vector<8x32xf32>
    %c1_27 = arith.constant 1 : index
    %c0_28 = arith.constant 0 : index
    %c0_29 = arith.constant 0 : index
    %50 = vector.load %arg11[%c1_27, %c0_28, %c0_29] : memref<2x8x32xf32, #tpu.memory_space<vmem>>, vector<1x8x32xf32>
    %51 = vector.shape_cast %50 : vector<1x8x32xf32> to vector<8x32xf32>
    %c0_30 = arith.constant 0 : index
    %c0_31 = arith.constant 0 : index
    %52 = vector.load %arg3[%c0_30, %c0_31] : memref<32x128xf32, #tpu.memory_space<vmem>>, vector<32x128xf32>
    %cst_32 = arith.constant dense<0.000000e+00> : vector<8x128xf32>
    %53 = tpu.matmul %41, %52, %cst_32 {dimension_numbers = #tpu.dot_dimension_numbers<[1], [0], [0], [1], [0, 0, 1, 1], [], []>} : vector<8x32xf32>, vector<32x128xf32>, vector<8x128xf32> -> vector<8x128xf32>
    %c0_33 = arith.constant 0 : index
    %c0_34 = arith.constant 0 : index
    %54 = vector.load %arg5[%c0_33, %c0_34] : memref<32x128xf32, #tpu.memory_space<vmem>>, vector<32x128xf32>
    %cst_35 = arith.constant dense<0.000000e+00> : vector<8x128xf32>
    %55 = tpu.matmul %49, %54, %cst_35 {dimension_numbers = #tpu.dot_dimension_numbers<[1], [0], [0], [1], [0, 0, 1, 1], [], []>} : vector<8x32xf32>, vector<32x128xf32>, vector<8x128xf32> -> vector<8x128xf32>
    %56 = arith.addf %53, %55 : vector<8x128xf32>
    %c0_36 = arith.constant 0 : index
    %c0_37 = arith.constant 0 : index
    %57 = vector.load %arg7[%c0_36, %c0_37] : memref<1x128xf32, #tpu.memory_space<vmem>>, vector<1x128xf32>
    %58 = vector.broadcast %57 : vector<1x128xf32> to vector<8x128xf32>
    %59 = arith.addf %56, %58 : vector<8x128xf32>
    %60 = vector.extract_strided_slice %59 {offsets = [0, 0], sizes = [8, 32], strides = [1, 1]} : vector<8x128xf32> to vector<8x32xf32>
    %61 = arith.negf %60 : vector<8x32xf32>
    %62 = math.exp %61 : vector<8x32xf32>
    %cst_38 = arith.constant 1.000000e+00 : f32
    %63 = vector.broadcast %cst_38 : f32 to vector<8x32xf32>
    %64 = arith.addf %63, %62 : vector<8x32xf32>
    %65 = arith.divf %63, %64 : vector<8x32xf32>
    %66 = vector.extract_strided_slice %59 {offsets = [0, 32], sizes = [8, 32], strides = [1, 1]} : vector<8x128xf32> to vector<8x32xf32>
    %67 = arith.negf %66 : vector<8x32xf32>
    %68 = math.exp %67 : vector<8x32xf32>
    %cst_39 = arith.constant 1.000000e+00 : f32
    %69 = vector.broadcast %cst_39 : f32 to vector<8x32xf32>
    %70 = arith.addf %69, %68 : vector<8x32xf32>
    %71 = arith.divf %69, %70 : vector<8x32xf32>
    %72 = vector.extract_strided_slice %59 {offsets = [0, 64], sizes = [8, 32], strides = [1, 1]} : vector<8x128xf32> to vector<8x32xf32>
    %73 = math.tanh %72 : vector<8x32xf32>
    %74 = vector.extract_strided_slice %59 {offsets = [0, 96], sizes = [8, 32], strides = [1, 1]} : vector<8x128xf32> to vector<8x32xf32>
    %75 = arith.negf %74 : vector<8x32xf32>
    %76 = math.exp %75 : vector<8x32xf32>
    %cst_40 = arith.constant 1.000000e+00 : f32
    %77 = vector.broadcast %cst_40 : f32 to vector<8x32xf32>
    %78 = arith.addf %77, %76 : vector<8x32xf32>
    %79 = arith.divf %77, %78 : vector<8x32xf32>
    %80 = arith.mulf %71, %51 : vector<8x32xf32>
    %81 = arith.mulf %65, %73 : vector<8x32xf32>
    %82 = arith.addf %80, %81 : vector<8x32xf32>
    %83 = math.tanh %82 : vector<8x32xf32>
    %84 = arith.mulf %79, %83 : vector<8x32xf32>
    %c1_41 = arith.constant 1 : index
    %c0_42 = arith.constant 0 : index
    %c0_43 = arith.constant 0 : index
    %85 = vector.load %arg10[%c1_41, %c0_42, %c0_43] : memref<2x8x32xf32, #tpu.memory_space<vmem>>, vector<1x8x32xf32>
    %86 = vector.shape_cast %85 : vector<1x8x32xf32> to vector<8x32xf32>
    %87 = vector.shape_cast %84 : vector<8x32xf32> to vector<1x8x32xf32>
    tpu.vector_store %arg10[%c1_41, %c0_42, %c0_43], %87 {strides = array<i32>} : memref<2x8x32xf32, #tpu.memory_space<vmem>>, vector<1x8x32xf32>,
    %c1_44 = arith.constant 1 : index
    %c0_45 = arith.constant 0 : index
    %c0_46 = arith.constant 0 : index
    %88 = vector.load %arg11[%c1_44, %c0_45, %c0_46] : memref<2x8x32xf32, #tpu.memory_space<vmem>>, vector<1x8x32xf32>
    %89 = vector.shape_cast %88 : vector<1x8x32xf32> to vector<8x32xf32>
    %90 = vector.shape_cast %82 : vector<8x32xf32> to vector<1x8x32xf32>
    tpu.vector_store %arg11[%c1_44, %c0_45, %c0_46], %90 {strides = array<i32>} : memref<2x8x32xf32, #tpu.memory_space<vmem>>, vector<1x8x32xf32>,
    %c7_i32 = arith.constant 7 : i32
    %91 = arith.cmpi eq, %arg0, %c7_i32 : i32
    %92 = arith.extui %91 : i1 to i32
    %c0_i32_47 = arith.constant 0 : i32
    %93 = arith.cmpi ne, %92, %c0_i32_47 : i32
    scf.if %93 {
      %c0_48 = arith.constant 0 : index
      %c0_49 = arith.constant 0 : index
      %c0_50 = arith.constant 0 : index
      %94 = vector.load %arg10[%c0_48, %c0_49, %c0_50] : memref<2x8x32xf32, #tpu.memory_space<vmem>>, vector<2x8x32xf32>
      %c0_51 = arith.constant 0 : index
      %c0_52 = arith.constant 0 : index
      %c0_53 = arith.constant 0 : index
      %95 = vector.load %arg8[%c0_51, %c0_52, %c0_53] : memref<2x8x32xf32, #tpu.memory_space<vmem>>, vector<2x8x32xf32>
      tpu.vector_store %arg8[%c0_51, %c0_52, %c0_53], %94 {strides = array<i32>} : memref<2x8x32xf32, #tpu.memory_space<vmem>>, vector<2x8x32xf32>,
      %c0_54 = arith.constant 0 : index
      %c0_55 = arith.constant 0 : index
      %c0_56 = arith.constant 0 : index
      %96 = vector.load %arg11[%c0_54, %c0_55, %c0_56] : memref<2x8x32xf32, #tpu.memory_space<vmem>>, vector<2x8x32xf32>
      %c0_57 = arith.constant 0 : index
      %c0_58 = arith.constant 0 : index
      %c0_59 = arith.constant 0 : index
      %97 = vector.load %arg9[%c0_57, %c0_58, %c0_59] : memref<2x8x32xf32, #tpu.memory_space<vmem>>, vector<2x8x32xf32>
      tpu.vector_store %arg9[%c0_57, %c0_58, %c0_59], %96 {strides = array<i32>} : memref<2x8x32xf32, #tpu.memory_space<vmem>>, vector<2x8x32xf32>,
    } else {
    }
    return
  }
  func.func @transform_0(%arg0: i32) -> (i32, i32, i32) {
    %c0_i32 = arith.constant 0 : i32
    %c0_i32_0 = arith.constant 0 : i32
    %c0_i32_1 = arith.constant 0 : i32
    return %arg0, %c0_i32, %c0_i32_0 : i32, i32, i32
  }
  func.func @transform_1(%arg0: i32) -> (i32, i32) {
    %c0_i32 = arith.constant 0 : i32
    %c0_i32_0 = arith.constant 0 : i32
    %c0_i32_1 = arith.constant 0 : i32
    return %c0_i32, %c0_i32_0 : i32, i32
  }
  func.func @transform_2(%arg0: i32) -> (i32, i32) {
    %c0_i32 = arith.constant 0 : i32
    %c0_i32_0 = arith.constant 0 : i32
    %c0_i32_1 = arith.constant 0 : i32
    return %c0_i32, %c0_i32_0 : i32, i32
  }
  func.func @transform_3(%arg0: i32) -> (i32, i32) {
    %c0_i32 = arith.constant 0 : i32
    %c0_i32_0 = arith.constant 0 : i32
    %c0_i32_1 = arith.constant 0 : i32
    return %c0_i32, %c0_i32_0 : i32, i32
  }
  func.func @transform_4(%arg0: i32) -> (i32, i32) {
    %c0_i32 = arith.constant 0 : i32
    %c0_i32_0 = arith.constant 0 : i32
    %c0_i32_1 = arith.constant 0 : i32
    return %c0_i32, %c0_i32_0 : i32, i32
  }
  func.func @transform_5(%arg0: i32) -> (i32, i32) {
    %c0_i32 = arith.constant 0 : i32
    %c0_i32_0 = arith.constant 0 : i32
    %c0_i32_1 = arith.constant 0 : i32
    return %c0_i32, %c0_i32_0 : i32, i32
  }
  func.func @transform_6(%arg0: i32) -> (i32, i32) {
    %c0_i32 = arith.constant 0 : i32
    %c0_i32_0 = arith.constant 0 : i32
    %c0_i32_1 = arith.constant 0 : i32
    return %c0_i32, %c0_i32_0 : i32, i32
  }
  func.func @transform_7(%arg0: i32) -> (i32, i32, i32) {
    %c0_i32 = arith.constant 0 : i32
    %c0_i32_0 = arith.constant 0 : i32
    %c0_i32_1 = arith.constant 0 : i32
    %c0_i32_2 = arith.constant 0 : i32
    return %c0_i32, %c0_i32_0, %c0_i32_1 : i32, i32, i32
  }
  func.func @transform_8(%arg0: i32) -> (i32, i32, i32) {
    %c0_i32 = arith.constant 0 : i32
    %c0_i32_0 = arith.constant 0 : i32
    %c0_i32_1 = arith.constant 0 : i32
    %c0_i32_2 = arith.constant 0 : i32
    return %c0_i32, %c0_i32_0, %c0_i32_1 : i32, i32, i32
  }
}

module attributes {stable_mosaic.version = 11 : i64} {
  func.func @_decoder_kernel(%arg0: i32, %arg1: memref<1x8x16xf32, #tpu.memory_space<vmem>>, %arg2: memref<2x8x32xf32, #tpu.memory_space<vmem>>, %arg3: memref<2x8x32xf32, #tpu.memory_space<vmem>>, %arg4: memref<16x128xf32, #tpu.memory_space<vmem>>, %arg5: memref<32x128xf32, #tpu.memory_space<vmem>>, %arg6: memref<32x128xf32, #tpu.memory_space<vmem>>, %arg7: memref<32x128xf32, #tpu.memory_space<vmem>>, %arg8: memref<1x128xf32, #tpu.memory_space<vmem>>, %arg9: memref<1x128xf32, #tpu.memory_space<vmem>>, %arg10: memref<1x8x32xf32, #tpu.memory_space<vmem>>, %arg11: memref<2x8x32xf32, #tpu.memory_space<vmem>>, %arg12: memref<2x8x32xf32, #tpu.memory_space<vmem>>) attributes {dimension_semantics = [#tpu.dimension_semantics<arbitrary>], iteration_bounds = array<i64: 7>, scalar_prefetch = 0 : i64, scratch_operands = 2 : i64, tpu.core_type = #tpu.core_type<tc>, window_params = [{transform_indices = @transform_0, window_bounds = array<i64: 1, 8, 16>}, {pipeline_mode = #tpu.pipeline_mode<synchronous>, transform_indices = @transform_1, window_bounds = array<i64: 2, 8, 32>}, {pipeline_mode = #tpu.pipeline_mode<synchronous>, transform_indices = @transform_2, window_bounds = array<i64: 2, 8, 32>}, {pipeline_mode = #tpu.pipeline_mode<synchronous>, transform_indices = @transform_3, window_bounds = array<i64: 16, 128>}, {pipeline_mode = #tpu.pipeline_mode<synchronous>, transform_indices = @transform_4, window_bounds = array<i64: 32, 128>}, {pipeline_mode = #tpu.pipeline_mode<synchronous>, transform_indices = @transform_5, window_bounds = array<i64: 32, 128>}, {pipeline_mode = #tpu.pipeline_mode<synchronous>, transform_indices = @transform_6, window_bounds = array<i64: 32, 128>}, {pipeline_mode = #tpu.pipeline_mode<synchronous>, transform_indices = @transform_7, window_bounds = array<i64: 1, 128>}, {pipeline_mode = #tpu.pipeline_mode<synchronous>, transform_indices = @transform_8, window_bounds = array<i64: 1, 128>}, {transform_indices = @transform_9, window_bounds = array<i64: 1, 8, 32>}]} {
    %c0_i32 = arith.constant 0 : i32
    %0 = arith.cmpi eq, %arg0, %c0_i32 : i32
    %1 = arith.extui %0 : i1 to i32
    %c0_i32_0 = arith.constant 0 : i32
    %2 = arith.cmpi ne, %1, %c0_i32_0 : i32
    scf.if %2 {
      %c0_50 = arith.constant 0 : index
      %c0_51 = arith.constant 0 : index
      %c0_52 = arith.constant 0 : index
      %94 = vector.load %arg2[%c0_50, %c0_51, %c0_52] : memref<2x8x32xf32, #tpu.memory_space<vmem>>, vector<2x8x32xf32>
      %c0_53 = arith.constant 0 : index
      %c0_54 = arith.constant 0 : index
      %c0_55 = arith.constant 0 : index
      %95 = vector.load %arg11[%c0_53, %c0_54, %c0_55] : memref<2x8x32xf32, #tpu.memory_space<vmem>>, vector<2x8x32xf32>
      tpu.vector_store %arg11[%c0_53, %c0_54, %c0_55], %94 {strides = array<i32>} : memref<2x8x32xf32, #tpu.memory_space<vmem>>, vector<2x8x32xf32>,
      %c0_56 = arith.constant 0 : index
      %c0_57 = arith.constant 0 : index
      %c0_58 = arith.constant 0 : index
      %96 = vector.load %arg3[%c0_56, %c0_57, %c0_58] : memref<2x8x32xf32, #tpu.memory_space<vmem>>, vector<2x8x32xf32>
      %c0_59 = arith.constant 0 : index
      %c0_60 = arith.constant 0 : index
      %c0_61 = arith.constant 0 : index
      %97 = vector.load %arg12[%c0_59, %c0_60, %c0_61] : memref<2x8x32xf32, #tpu.memory_space<vmem>>, vector<2x8x32xf32>
      tpu.vector_store %arg12[%c0_59, %c0_60, %c0_61], %96 {strides = array<i32>} : memref<2x8x32xf32, #tpu.memory_space<vmem>>, vector<2x8x32xf32>,
    } else {
    }
    %c0 = arith.constant 0 : index
    %c0_1 = arith.constant 0 : index
    %c0_2 = arith.constant 0 : index
    %3 = vector.load %arg1[%c0, %c0_1, %c0_2] : memref<1x8x16xf32, #tpu.memory_space<vmem>>, vector<1x8x16xf32>
    %4 = vector.shape_cast %3 : vector<1x8x16xf32> to vector<8x16xf32>
    %c0_3 = arith.constant 0 : index
    %c0_4 = arith.constant 0 : index
    %c0_5 = arith.constant 0 : index
    %5 = vector.load %arg11[%c0_3, %c0_4, %c0_5] : memref<2x8x32xf32, #tpu.memory_space<vmem>>, vector<1x8x32xf32>
    %6 = vector.shape_cast %5 : vector<1x8x32xf32> to vector<8x32xf32>
    %c0_6 = arith.constant 0 : index
    %c0_7 = arith.constant 0 : index
    %c0_8 = arith.constant 0 : index
    %7 = vector.load %arg12[%c0_6, %c0_7, %c0_8] : memref<2x8x32xf32, #tpu.memory_space<vmem>>, vector<1x8x32xf32>
    %8 = vector.shape_cast %7 : vector<1x8x32xf32> to vector<8x32xf32>
    %c0_9 = arith.constant 0 : index
    %c0_10 = arith.constant 0 : index
    %9 = vector.load %arg4[%c0_9, %c0_10] : memref<16x128xf32, #tpu.memory_space<vmem>>, vector<16x128xf32>
    %cst = arith.constant dense<0.000000e+00> : vector<8x128xf32>
    %10 = tpu.matmul %4, %9, %cst {dimension_numbers = #tpu.dot_dimension_numbers<[1], [0], [0], [1], [0, 0, 1, 1], [], []>} : vector<8x16xf32>, vector<16x128xf32>, vector<8x128xf32> -> vector<8x128xf32>
    %c0_11 = arith.constant 0 : index
    %c0_12 = arith.constant 0 : index
    %11 = vector.load %arg6[%c0_11, %c0_12] : memref<32x128xf32, #tpu.memory_space<vmem>>, vector<32x128xf32>
    %cst_13 = arith.constant dense<0.000000e+00> : vector<8x128xf32>
    %12 = tpu.matmul %6, %11, %cst_13 {dimension_numbers = #tpu.dot_dimension_numbers<[1], [0], [0], [1], [0, 0, 1, 1], [], []>} : vector<8x32xf32>, vector<32x128xf32>, vector<8x128xf32> -> vector<8x128xf32>
    %13 = arith.addf %10, %12 : vector<8x128xf32>
    %c0_14 = arith.constant 0 : index
    %c0_15 = arith.constant 0 : index
    %14 = vector.load %arg8[%c0_14, %c0_15] : memref<1x128xf32, #tpu.memory_space<vmem>>, vector<1x128xf32>
    %15 = vector.broadcast %14 : vector<1x128xf32> to vector<8x128xf32>
    %16 = arith.addf %13, %15 : vector<8x128xf32>
    %17 = vector.extract_strided_slice %16 {offsets = [0, 0], sizes = [8, 32], strides = [1, 1]} : vector<8x128xf32> to vector<8x32xf32>
    %18 = arith.negf %17 : vector<8x32xf32>
    %19 = math.exp %18 : vector<8x32xf32>
    %cst_16 = arith.constant 1.000000e+00 : f32
    %20 = vector.broadcast %cst_16 : f32 to vector<8x32xf32>
    %21 = arith.addf %20, %19 : vector<8x32xf32>
    %22 = arith.divf %20, %21 : vector<8x32xf32>
    %23 = vector.extract_strided_slice %16 {offsets = [0, 32], sizes = [8, 32], strides = [1, 1]} : vector<8x128xf32> to vector<8x32xf32>
    %24 = arith.negf %23 : vector<8x32xf32>
    %25 = math.exp %24 : vector<8x32xf32>
    %cst_17 = arith.constant 1.000000e+00 : f32
    %26 = vector.broadcast %cst_17 : f32 to vector<8x32xf32>
    %27 = arith.addf %26, %25 : vector<8x32xf32>
    %28 = arith.divf %26, %27 : vector<8x32xf32>
    %29 = vector.extract_strided_slice %16 {offsets = [0, 64], sizes = [8, 32], strides = [1, 1]} : vector<8x128xf32> to vector<8x32xf32>
    %30 = math.tanh %29 : vector<8x32xf32>
    %31 = vector.extract_strided_slice %16 {offsets = [0, 96], sizes = [8, 32], strides = [1, 1]} : vector<8x128xf32> to vector<8x32xf32>
    %32 = arith.negf %31 : vector<8x32xf32>
    %33 = math.exp %32 : vector<8x32xf32>
    %cst_18 = arith.constant 1.000000e+00 : f32
    %34 = vector.broadcast %cst_18 : f32 to vector<8x32xf32>
    %35 = arith.addf %34, %33 : vector<8x32xf32>
    %36 = arith.divf %34, %35 : vector<8x32xf32>
    %37 = arith.mulf %28, %8 : vector<8x32xf32>
    %38 = arith.mulf %22, %30 : vector<8x32xf32>
    %39 = arith.addf %37, %38 : vector<8x32xf32>
    %40 = math.tanh %39 : vector<8x32xf32>
    %41 = arith.mulf %36, %40 : vector<8x32xf32>
    %c0_19 = arith.constant 0 : index
    %c0_20 = arith.constant 0 : index
    %c0_21 = arith.constant 0 : index
    %42 = vector.load %arg11[%c0_19, %c0_20, %c0_21] : memref<2x8x32xf32, #tpu.memory_space<vmem>>, vector<1x8x32xf32>
    %43 = vector.shape_cast %42 : vector<1x8x32xf32> to vector<8x32xf32>
    %44 = vector.shape_cast %41 : vector<8x32xf32> to vector<1x8x32xf32>
    tpu.vector_store %arg11[%c0_19, %c0_20, %c0_21], %44 {strides = array<i32>} : memref<2x8x32xf32, #tpu.memory_space<vmem>>, vector<1x8x32xf32>,
    %c0_22 = arith.constant 0 : index
    %c0_23 = arith.constant 0 : index
    %c0_24 = arith.constant 0 : index
    %45 = vector.load %arg12[%c0_22, %c0_23, %c0_24] : memref<2x8x32xf32, #tpu.memory_space<vmem>>, vector<1x8x32xf32>
    %46 = vector.shape_cast %45 : vector<1x8x32xf32> to vector<8x32xf32>
    %47 = vector.shape_cast %39 : vector<8x32xf32> to vector<1x8x32xf32>
    tpu.vector_store %arg12[%c0_22, %c0_23, %c0_24], %47 {strides = array<i32>} : memref<2x8x32xf32, #tpu.memory_space<vmem>>, vector<1x8x32xf32>,
    %c1 = arith.constant 1 : index
    %c0_25 = arith.constant 0 : index
    %c0_26 = arith.constant 0 : index
    %48 = vector.load %arg11[%c1, %c0_25, %c0_26] : memref<2x8x32xf32, #tpu.memory_space<vmem>>, vector<1x8x32xf32>
    %49 = vector.shape_cast %48 : vector<1x8x32xf32> to vector<8x32xf32>
    %c1_27 = arith.constant 1 : index
    %c0_28 = arith.constant 0 : index
    %c0_29 = arith.constant 0 : index
    %50 = vector.load %arg12[%c1_27, %c0_28, %c0_29] : memref<2x8x32xf32, #tpu.memory_space<vmem>>, vector<1x8x32xf32>
    %51 = vector.shape_cast %50 : vector<1x8x32xf32> to vector<8x32xf32>
    %c0_30 = arith.constant 0 : index
    %c0_31 = arith.constant 0 : index
    %52 = vector.load %arg5[%c0_30, %c0_31] : memref<32x128xf32, #tpu.memory_space<vmem>>, vector<32x128xf32>
    %cst_32 = arith.constant dense<0.000000e+00> : vector<8x128xf32>
    %53 = tpu.matmul %41, %52, %cst_32 {dimension_numbers = #tpu.dot_dimension_numbers<[1], [0], [0], [1], [0, 0, 1, 1], [], []>} : vector<8x32xf32>, vector<32x128xf32>, vector<8x128xf32> -> vector<8x128xf32>
    %c0_33 = arith.constant 0 : index
    %c0_34 = arith.constant 0 : index
    %54 = vector.load %arg7[%c0_33, %c0_34] : memref<32x128xf32, #tpu.memory_space<vmem>>, vector<32x128xf32>
    %cst_35 = arith.constant dense<0.000000e+00> : vector<8x128xf32>
    %55 = tpu.matmul %49, %54, %cst_35 {dimension_numbers = #tpu.dot_dimension_numbers<[1], [0], [0], [1], [0, 0, 1, 1], [], []>} : vector<8x32xf32>, vector<32x128xf32>, vector<8x128xf32> -> vector<8x128xf32>
    %56 = arith.addf %53, %55 : vector<8x128xf32>
    %c0_36 = arith.constant 0 : index
    %c0_37 = arith.constant 0 : index
    %57 = vector.load %arg9[%c0_36, %c0_37] : memref<1x128xf32, #tpu.memory_space<vmem>>, vector<1x128xf32>
    %58 = vector.broadcast %57 : vector<1x128xf32> to vector<8x128xf32>
    %59 = arith.addf %56, %58 : vector<8x128xf32>
    %60 = vector.extract_strided_slice %59 {offsets = [0, 0], sizes = [8, 32], strides = [1, 1]} : vector<8x128xf32> to vector<8x32xf32>
    %61 = arith.negf %60 : vector<8x32xf32>
    %62 = math.exp %61 : vector<8x32xf32>
    %cst_38 = arith.constant 1.000000e+00 : f32
    %63 = vector.broadcast %cst_38 : f32 to vector<8x32xf32>
    %64 = arith.addf %63, %62 : vector<8x32xf32>
    %65 = arith.divf %63, %64 : vector<8x32xf32>
    %66 = vector.extract_strided_slice %59 {offsets = [0, 32], sizes = [8, 32], strides = [1, 1]} : vector<8x128xf32> to vector<8x32xf32>
    %67 = arith.negf %66 : vector<8x32xf32>
    %68 = math.exp %67 : vector<8x32xf32>
    %cst_39 = arith.constant 1.000000e+00 : f32
    %69 = vector.broadcast %cst_39 : f32 to vector<8x32xf32>
    %70 = arith.addf %69, %68 : vector<8x32xf32>
    %71 = arith.divf %69, %70 : vector<8x32xf32>
    %72 = vector.extract_strided_slice %59 {offsets = [0, 64], sizes = [8, 32], strides = [1, 1]} : vector<8x128xf32> to vector<8x32xf32>
    %73 = math.tanh %72 : vector<8x32xf32>
    %74 = vector.extract_strided_slice %59 {offsets = [0, 96], sizes = [8, 32], strides = [1, 1]} : vector<8x128xf32> to vector<8x32xf32>
    %75 = arith.negf %74 : vector<8x32xf32>
    %76 = math.exp %75 : vector<8x32xf32>
    %cst_40 = arith.constant 1.000000e+00 : f32
    %77 = vector.broadcast %cst_40 : f32 to vector<8x32xf32>
    %78 = arith.addf %77, %76 : vector<8x32xf32>
    %79 = arith.divf %77, %78 : vector<8x32xf32>
    %80 = arith.mulf %71, %51 : vector<8x32xf32>
    %81 = arith.mulf %65, %73 : vector<8x32xf32>
    %82 = arith.addf %80, %81 : vector<8x32xf32>
    %83 = math.tanh %82 : vector<8x32xf32>
    %84 = arith.mulf %79, %83 : vector<8x32xf32>
    %c1_41 = arith.constant 1 : index
    %c0_42 = arith.constant 0 : index
    %c0_43 = arith.constant 0 : index
    %85 = vector.load %arg11[%c1_41, %c0_42, %c0_43] : memref<2x8x32xf32, #tpu.memory_space<vmem>>, vector<1x8x32xf32>
    %86 = vector.shape_cast %85 : vector<1x8x32xf32> to vector<8x32xf32>
    %87 = vector.shape_cast %84 : vector<8x32xf32> to vector<1x8x32xf32>
    tpu.vector_store %arg11[%c1_41, %c0_42, %c0_43], %87 {strides = array<i32>} : memref<2x8x32xf32, #tpu.memory_space<vmem>>, vector<1x8x32xf32>,
    %c1_44 = arith.constant 1 : index
    %c0_45 = arith.constant 0 : index
    %c0_46 = arith.constant 0 : index
    %88 = vector.load %arg12[%c1_44, %c0_45, %c0_46] : memref<2x8x32xf32, #tpu.memory_space<vmem>>, vector<1x8x32xf32>
    %89 = vector.shape_cast %88 : vector<1x8x32xf32> to vector<8x32xf32>
    %90 = vector.shape_cast %82 : vector<8x32xf32> to vector<1x8x32xf32>
    tpu.vector_store %arg12[%c1_44, %c0_45, %c0_46], %90 {strides = array<i32>} : memref<2x8x32xf32, #tpu.memory_space<vmem>>, vector<1x8x32xf32>,
    %c0_47 = arith.constant 0 : index
    %c0_48 = arith.constant 0 : index
    %c0_49 = arith.constant 0 : index
    %91 = vector.load %arg10[%c0_47, %c0_48, %c0_49] : memref<1x8x32xf32, #tpu.memory_space<vmem>>, vector<1x8x32xf32>
    %92 = vector.shape_cast %91 : vector<1x8x32xf32> to vector<8x32xf32>
    %93 = vector.shape_cast %84 : vector<8x32xf32> to vector<1x8x32xf32>
    tpu.vector_store %arg10[%c0_47, %c0_48, %c0_49], %93 {strides = array<i32>} : memref<1x8x32xf32, #tpu.memory_space<vmem>>, vector<1x8x32xf32>,
    return
  }
  func.func @transform_0(%arg0: i32) -> (i32, i32, i32) {
    %c0_i32 = arith.constant 0 : i32
    %c0_i32_0 = arith.constant 0 : i32
    %c0_i32_1 = arith.constant 0 : i32
    return %arg0, %c0_i32, %c0_i32_0 : i32, i32, i32
  }
  func.func @transform_1(%arg0: i32) -> (i32, i32, i32) {
    %c0_i32 = arith.constant 0 : i32
    %c0_i32_0 = arith.constant 0 : i32
    %c0_i32_1 = arith.constant 0 : i32
    %c0_i32_2 = arith.constant 0 : i32
    return %c0_i32, %c0_i32_0, %c0_i32_1 : i32, i32, i32
  }
  func.func @transform_2(%arg0: i32) -> (i32, i32, i32) {
    %c0_i32 = arith.constant 0 : i32
    %c0_i32_0 = arith.constant 0 : i32
    %c0_i32_1 = arith.constant 0 : i32
    %c0_i32_2 = arith.constant 0 : i32
    return %c0_i32, %c0_i32_0, %c0_i32_1 : i32, i32, i32
  }
  func.func @transform_3(%arg0: i32) -> (i32, i32) {
    %c0_i32 = arith.constant 0 : i32
    %c0_i32_0 = arith.constant 0 : i32
    %c0_i32_1 = arith.constant 0 : i32
    return %c0_i32, %c0_i32_0 : i32, i32
  }
  func.func @transform_4(%arg0: i32) -> (i32, i32) {
    %c0_i32 = arith.constant 0 : i32
    %c0_i32_0 = arith.constant 0 : i32
    %c0_i32_1 = arith.constant 0 : i32
    return %c0_i32, %c0_i32_0 : i32, i32
  }
  func.func @transform_5(%arg0: i32) -> (i32, i32) {
    %c0_i32 = arith.constant 0 : i32
    %c0_i32_0 = arith.constant 0 : i32
    %c0_i32_1 = arith.constant 0 : i32
    return %c0_i32, %c0_i32_0 : i32, i32
  }
  func.func @transform_6(%arg0: i32) -> (i32, i32) {
    %c0_i32 = arith.constant 0 : i32
    %c0_i32_0 = arith.constant 0 : i32
    %c0_i32_1 = arith.constant 0 : i32
    return %c0_i32, %c0_i32_0 : i32, i32
  }
  func.func @transform_7(%arg0: i32) -> (i32, i32) {
    %c0_i32 = arith.constant 0 : i32
    %c0_i32_0 = arith.constant 0 : i32
    %c0_i32_1 = arith.constant 0 : i32
    return %c0_i32, %c0_i32_0 : i32, i32
  }
  func.func @transform_8(%arg0: i32) -> (i32, i32) {
    %c0_i32 = arith.constant 0 : i32
    %c0_i32_0 = arith.constant 0 : i32
    %c0_i32_1 = arith.constant 0 : i32
    return %c0_i32, %c0_i32_0 : i32, i32
  }
  func.func @transform_9(%arg0: i32) -> (i32, i32, i32) {
    %c0_i32 = arith.constant 0 : i32
    %c0_i32_0 = arith.constant 0 : i32
    %c0_i32_1 = arith.constant 0 : i32
    return %arg0, %c0_i32, %c0_i32_0 : i32, i32, i32
  }
}

module attributes {stable_mosaic.version = 11 : i64} {
  func.func @_fc_kernel(%arg0: memref<56x32xf32, #tpu.memory_space<vmem>>, %arg1: memref<32x128xf32, #tpu.memory_space<vmem>>, %arg2: memref<1x128xf32, #tpu.memory_space<vmem>>, %arg3: memref<56x128xf32, #tpu.memory_space<vmem>>) attributes {dimension_semantics = [], scalar_prefetch = 0 : i64, scratch_operands = 0 : i64, tpu.core_type = #tpu.core_type<tc>} {
    %c0 = arith.constant 0 : index
    %c0_0 = arith.constant 0 : index
    %0 = vector.load %arg0[%c0, %c0_0] : memref<56x32xf32, #tpu.memory_space<vmem>>, vector<56x32xf32>
    %c0_1 = arith.constant 0 : index
    %c0_2 = arith.constant 0 : index
    %1 = vector.load %arg1[%c0_1, %c0_2] : memref<32x128xf32, #tpu.memory_space<vmem>>, vector<32x128xf32>
    %cst = arith.constant dense<0.000000e+00> : vector<56x128xf32>
    %2 = tpu.matmul %0, %1, %cst {dimension_numbers = #tpu.dot_dimension_numbers<[1], [0], [0], [1], [0, 0, 1, 1], [], []>} : vector<56x32xf32>, vector<32x128xf32>, vector<56x128xf32> -> vector<56x128xf32>
    %c0_3 = arith.constant 0 : index
    %c0_4 = arith.constant 0 : index
    %3 = vector.load %arg2[%c0_3, %c0_4] : memref<1x128xf32, #tpu.memory_space<vmem>>, vector<1x128xf32>
    %4 = vector.broadcast %3 : vector<1x128xf32> to vector<56x128xf32>
    %5 = arith.addf %2, %4 : vector<56x128xf32>
    %c0_5 = arith.constant 0 : index
    %c0_6 = arith.constant 0 : index
    %6 = vector.load %arg3[%c0_5, %c0_6] : memref<56x128xf32, #tpu.memory_space<vmem>>, vector<56x128xf32>
    tpu.vector_store %arg3[%c0_5, %c0_6], %5 {strides = array<i32>} : memref<56x128xf32, #tpu.memory_space<vmem>>, vector<56x128xf32>,
    return
  }
}

</mosaic_0001>

<llo_original>
// kernel: seq2seq_forward.5
$region0: #{seq2seq_forward.5}
  #allocation0 [shape = 'u32[]', space=smem, size = 0x4, offset = 0x4, fixed_abs, tag = 'smem constant byte address 0x4 - core index']
  #allocation1 [shape = 'u32[72,128]{1,0:T(1,128)}', space=vmem, size = 0x9000, scoped, tag = 'internal scratch']
  %s0 = inlined_call_operand.vmem [shape: f32[56,32], index: 0, kind: input, shape index: {}]
  %s1 = inlined_call_operand.vmem [shape: f32[32,128], index: 1, kind: input, shape index: {}]
  %s2 = inlined_call_operand.vmem [shape: f32[1,128], index: 2, kind: input, shape index: {}]
  %s3 = inlined_call_operand.vmem [shape: f32[56,128], index: 3, kind: output, shape index: {}]
  %s4 = sld [smem:[#allocation0]]
  $region22: #{seq2seq_forward.5} parent=0
    _
  %s6 = ssub.s32 1, %s4
  %s7 = scalar_select 0, %s6, %s4
  // Predicated region
  $region2: #{seq2seq_forward.5} parent=0 // pred_check
    _
  $region3: #{seq2seq_forward.5} parent=0 // pred_check_branch
    %9 = sbr.rel (0) target = $region5
  $region4: #{seq2seq_forward.5} parent=0 // pred_region
    _
  $region5: #{seq2seq_forward.5} parent=0 // pred_fallthru
    _
  // Predicated region
  $region6: #{seq2seq_forward.5} parent=0 // pred_check
    _
  $region7: #{seq2seq_forward.5} parent=0 // pred_check_branch
    %11 = sbr.rel (0) target = $region9
  $region8: #{seq2seq_forward.5} parent=0 // pred_region
    _
  $region9: #{seq2seq_forward.5} parent=0 // pred_fallthru
    _
  // Predicated region
  $region10: #{seq2seq_forward.5} parent=0 // pred_check
    _
  $region11: #{seq2seq_forward.5} parent=0 // pred_check_branch
    %13 = sbr.rel (0) target = $region13
  $region12: #{seq2seq_forward.5} parent=0 // pred_region
    _
  $region13: #{seq2seq_forward.5} parent=0 // pred_fallthru
    _
  %v14 = vld [vmem:[%s0] sm:$0xff]
  %v15 = vld [vmem:[%s0 + $0x8] sm:$0xff]
  %v16 = vld [vmem:[%s0 + $0x10] sm:$0xff]
  %v17 = vld [vmem:[%s0 + $0x18] sm:$0xff]
  %v18 = vld [vmem:[%s0 + $0x20] sm:$0xff]
  %v19 = vld [vmem:[%s0 + $0x28] sm:$0xff]
  %v20 = vld [vmem:[%s0 + $0x30] sm:$0xff]
  %v21 = vld [vmem:[%s1] sm:$0xff]
  %v22 = vld [vmem:[%s1 + $0x8] sm:$0xff]
  %v23 = vld [vmem:[%s1 + $0x10] sm:$0xff]
  %v24 = vld [vmem:[%s1 + $0x18] sm:$0xff]
  %v25 = vld [vmem:[%s2] sm:$0x1]
  %v27 = vperm.slane %v25, 0
  %vm29 = vcmask 261120
  %v31 = vsel %vm29, %v14, 0
  %v34 = vsel %vm29, %v15, 0
  %v37 = vsel %vm29, %v16, 0
  %v40 = vsel %vm29, %v17, 0
  %v43 = vsel %vm29, %v18, 0
  %v46 = vsel %vm29, %v19, 0
  %v49 = vsel %vm29, %v20, 0
  %51 = vmatpush.msra.mxu0 0.0
  %52 = vmatpush.msra.mxu0 0.0
  %53 = vmatpush.msra.mxu0 0.0
  %54 = vmatpush.msra.mxu0 0.0
  %55 = vmatpush.msra.mxu0 0.0
  %56 = vmatpush.msra.mxu0 0.0
  %57 = vmatpush.msra.mxu0 0.0
  %58 = vmatpush.msra.mxu0 0.0
  %59 = vmatpush.msra.mxu0 0.0
  %60 = vmatpush.msra.mxu0 0.0
  %61 = vmatpush.msra.mxu0 0.0
  %62 = vmatpush.msra.mxu0 0.0
  %63 = vmatpush.msra.mxu0 %v24
  %64 = vmatpush.msra.mxu0 %v23
  %65 = vmatpush.msra.mxu0 %v22
  %66 = vmatpush.msra.mxu0 %v21
  %67 = vmatmul.f32.gmra.mxu0 %v31
  %v68 = vpop.f32.mrf.mxu0
  %v69 = vadd.f32 %v27, %v68
  %70 = vmatmul.f32.gmra.mxu0 %v34
  %v71 = vpop.f32.mrf.mxu0
  %v72 = vadd.f32 %v27, %v71
  %73 = vmatmul.f32.gmra.mxu0 %v37
  %v74 = vpop.f32.mrf.mxu0
  %v75 = vadd.f32 %v27, %v74
  %76 = vmatmul.f32.gmra.mxu0 %v40
  %v77 = vpop.f32.mrf.mxu0
  %v78 = vadd.f32 %v27, %v77
  %79 = vmatmul.f32.gmra.mxu0 %v43
  %v80 = vpop.f32.mrf.mxu0
  %v81 = vadd.f32 %v27, %v80
  %82 = vmatmul.f32.gmra.mxu0 %v46
  %v83 = vpop.f32.mrf.mxu0
  %v84 = vadd.f32 %v27, %v83
  %85 = vmatmul.f32.gmra.mxu0 %v49
  %v86 = vpop.f32.mrf.mxu0
  %v87 = vadd.f32 %v27, %v86
  %88 = vdwg.mxu0
  %89 = vst [vmem:[%s3] sm:$0xff] %v69
  %90 = vst [vmem:[%s3 + $0x8] sm:$0xff] %v72
  %91 = vst [vmem:[%s3 + $0x10] sm:$0xff] %v75
  %92 = vst [vmem:[%s3 + $0x18] sm:$0xff] %v78
  %93 = vst [vmem:[%s3 + $0x20] sm:$0xff] %v81
  %94 = vst [vmem:[%s3 + $0x28] sm:$0xff] %v84
  %95 = vst [vmem:[%s3 + $0x30] sm:$0xff] %v87
  // Predicated region
  $region14: #{seq2seq_forward.5} parent=0 // pred_check
    _
  $region15: #{seq2seq_forward.5} parent=0 // pred_check_branch
    %97 = sbr.rel (0) target = $region17
  $region16: #{seq2seq_forward.5} parent=0 // pred_region
    _
  $region17: #{seq2seq_forward.5} parent=0 // pred_fallthru
    _
  // Predicated region
  $region18: #{seq2seq_forward.5} parent=0 // pred_check
    _
  $region19: #{seq2seq_forward.5} parent=0 // pred_check_branch
    %99 = sbr.rel (0) target = $region21
  $region20: #{seq2seq_forward.5} parent=0 // pred_region
    _
  $region21: #{seq2seq_forward.5} parent=0 // pred_fallthru
    _

// kernel: seq2seq_forward.3
$region0: #{seq2seq_forward.3}
  #allocation0 [shape = 'u32[]', space=smem, size = 0x4, offset = 0x4, fixed_abs, tag = 'smem constant byte address 0x4 - core index']
  #allocation1 [shape = 'u32[72,128]{1,0:T(1,128)}', space=vmem, size = 0x9000, scoped, tag = 'internal scratch']
  #allocation2 [shape = 'f32[2,8,32]{2,1,0:T(8,128)}', space=vmem, size = 0x2000, scoped, tag = 'scratch operand']
  #allocation3 [shape = 'f32[2,8,32]{2,1,0:T(8,128)}', space=vmem, size = 0x2000, scoped, tag = 'scratch operand']
  %s0 = inlined_call_operand.vmem [shape: f32[8,8,16], index: 0, kind: input, shape index: {}]
  %s1 = inlined_call_operand.vmem [shape: f32[16,128], index: 1, kind: input, shape index: {}]
  %s2 = inlined_call_operand.vmem [shape: f32[32,128], index: 2, kind: input, shape index: {}]
  %s3 = inlined_call_operand.vmem [shape: f32[32,128], index: 3, kind: input, shape index: {}]
  %s4 = inlined_call_operand.vmem [shape: f32[32,128], index: 4, kind: input, shape index: {}]
  %s5 = inlined_call_operand.vmem [shape: f32[1,128], index: 5, kind: input, shape index: {}]
  %s6 = inlined_call_operand.vmem [shape: f32[1,128], index: 6, kind: input, shape index: {}]
  %s7 = inlined_call_operand.vmem [shape: f32[2,8,32], index: 7, kind: output, shape index: {0}]
  %s8 = inlined_call_operand.vmem [shape: f32[2,8,32], index: 8, kind: output, shape index: {1}]
  %9 = xla_tuple %s7, %s8
  %s10 = sld [smem:[#allocation0]]
  $region77: #{seq2seq_forward.3} parent=0
    _
  %s12 = ssub.s32 1, %s10
  %s13 = scalar_select 0, %s12, %s10
  loop: start=0, step=1, limit=10
  $region2: #{seq2seq_forward.3} parent=0 // loop_pre_header
    _
  $region3: #{seq2seq_forward.3} parent=0 // loop_header
    %s15 = sphi 0, %s19
    %p16 = scmp.ge.s32.totalorder %s15, 10
    %s25 = sphi 0, %s27
    %s28 = sphi 0, %s25
    %s29 = sphi 0, %s28
    %s45 = sphi 0, %s29
    %s49 = sphi 0, %s49
    %s51 = sphi 0, %s49
    %s52 = sphi 0, %s51
    %s66 = sphi 0, %s52
    %s70 = sphi 0, %s70
    %s72 = sphi 0, %s70
    %s73 = sphi 0, %s72
    %s87 = sphi 0, %s73
    %s91 = sphi 0, %s91
    %s93 = sphi 0, %s91
    %s94 = sphi 0, %s93
    %s108 = sphi 0, %s94
    %s112 = sphi 0, %s112
    %s114 = sphi 0, %s112
    %s115 = sphi 0, %s114
    %s129 = sphi 0, %s115
    %s133 = sphi 0, %s133
    %s135 = sphi 0, %s133
    %s136 = sphi 0, %s135
    %s150 = sphi 0, %s136
    %s154 = sphi 0, %s154
    %s156 = sphi 0, %s154
    %s157 = sphi 0, %s156
    %s171 = sphi 0, %s157
    %s175 = sphi 0, %s175
    %s177 = sphi 0, %s175
    %s178 = sphi 0, %s177
    %s192 = sphi 0, %s178
    %s196 = sphi 0, %s196
    %s198 = sphi 0, %s196
    %s199 = sphi 0, %s198
    %s213 = sphi 0, %s199
  $region4: #{seq2seq_forward.3} parent=0 // loop_header_branch
    %18 = sbr.rel (%p16) target = $region8
  $region5: #{seq2seq_forward.3} parent=0 // loop_body
    %s20 = ssub.s32 %s15, 1
    %s21 = ssub.s32 %s15, 2
    %s22 = sadd.s32 %s15, 1
    %s23 = ssub.s32 %s15, %s22
    %p24 = scmp.eq.s32.totalorder %s23, 0
    %s26 = sadd.s32 %s25, 1
    %s27 = scalar_select %p24, %s25, %s26
    %p30 = pneg %p24
    %p31 = scmp.eq.s32.totalorder %s15, 7
    %p32 = por %p30, %p31
    %p33 = scmp.ne.s32.totalorder %s25, %s28
    %p34 = scmp.eq.s32.totalorder %s15, 0
    %p35 = por %p33, %p34
    %p36 = scmp.ne.s32.totalorder %s25, %s28
    %p37 = scmp.eq.s32.totalorder %s20, 7
    %p38 = por %p36, %p37
    %p39 = scmp.ne.s32.totalorder %s28, %s29
    %p40 = scmp.eq.s32.totalorder %s20, 0
    %p41 = por %p39, %p40
    %p42 = scmp.ne.s32.totalorder %s28, %s29
    %p43 = scmp.eq.s32.totalorder %s21, 7
    %p44 = por %p42, %p43
    %p46 = scmp.ne.s32.totalorder %s29, %s45
    %p47 = scmp.eq.s32.totalorder %s21, 0
    %p48 = por %p46, %p47
    %s50 = sadd.s32 %s49, 1
    %p53 = scmp.eq.s32.totalorder %s15, 7
    %p54 = scmp.ne.s32.totalorder %s49, %s51
    %p55 = scmp.eq.s32.totalorder %s15, 0
    %p56 = por %p54, %p55
    %p57 = scmp.ne.s32.totalorder %s49, %s51
    %p58 = scmp.eq.s32.totalorder %s20, 7
    %p59 = por %p57, %p58
    %p60 = scmp.ne.s32.totalorder %s51, %s52
    %p61 = scmp.eq.s32.totalorder %s20, 0
    %p62 = por %p60, %p61
    %p63 = scmp.ne.s32.totalorder %s51, %s52
    %p64 = scmp.eq.s32.totalorder %s21, 7
    %p65 = por %p63, %p64
    %p67 = scmp.ne.s32.totalorder %s52, %s66
    %p68 = scmp.eq.s32.totalorder %s21, 0
    %p69 = por %p67, %p68
    %s71 = sadd.s32 %s70, 1
    %p74 = scmp.eq.s32.totalorder %s15, 7
    %p75 = scmp.ne.s32.totalorder %s70, %s72
    %p76 = scmp.eq.s32.totalorder %s15, 0
    %p77 = por %p75, %p76
    %p78 = scmp.ne.s32.totalorder %s70, %s72
    %p79 = scmp.eq.s32.totalorder %s20, 7
    %p80 = por %p78, %p79
    %p81 = scmp.ne.s32.totalorder %s72, %s73
    %p82 = scmp.eq.s32.totalorder %s20, 0
    %p83 = por %p81, %p82
    %p84 = scmp.ne.s32.totalorder %s72, %s73
    %p85 = scmp.eq.s32.totalorder %s21, 7
    %p86 = por %p84, %p85
    %p88 = scmp.ne.s32.totalorder %s73, %s87
    %p89 = scmp.eq.s32.totalorder %s21, 0
    %p90 = por %p88, %p89
    %s92 = sadd.s32 %s91, 1
    %p95 = scmp.eq.s32.totalorder %s15, 7
    %p96 = scmp.ne.s32.totalorder %s91, %s93
    %p97 = scmp.eq.s32.totalorder %s15, 0
    %p98 = por %p96, %p97
    %p99 = scmp.ne.s32.totalorder %s91, %s93
    %p100 = scmp.eq.s32.totalorder %s20, 7
    %p101 = por %p99, %p100
    %p102 = scmp.ne.s32.totalorder %s93, %s94
    %p103 = scmp.eq.s32.totalorder %s20, 0
    %p104 = por %p102, %p103
    %p105 = scmp.ne.s32.totalorder %s93, %s94
    %p106 = scmp.eq.s32.totalorder %s21, 7
    %p107 = por %p105, %p106
    %p109 = scmp.ne.s32.totalorder %s94, %s108
    %p110 = scmp.eq.s32.totalorder %s21, 0
    %p111 = por %p109, %p110
    %s113 = sadd.s32 %s112, 1
    %p116 = scmp.eq.s32.totalorder %s15, 7
    %p117 = scmp.ne.s32.totalorder %s112, %s114
    %p118 = scmp.eq.s32.totalorder %s15, 0
    %p119 = por %p117, %p118
    %p120 = scmp.ne.s32.totalorder %s112, %s114
    %p121 = scmp.eq.s32.totalorder %s20, 7
    %p122 = por %p120, %p121
    %p123 = scmp.ne.s32.totalorder %s114, %s115
    %p124 = scmp.eq.s32.totalorder %s20, 0
    %p125 = por %p123, %p124
    %p126 = scmp.ne.s32.totalorder %s114, %s115
    %p127 = scmp.eq.s32.totalorder %s21, 7
    %p128 = por %p126, %p127
    %p130 = scmp.ne.s32.totalorder %s115, %s129
    %p131 = scmp.eq.s32.totalorder %s21, 0
    %p132 = por %p130, %p131
    %s134 = sadd.s32 %s133, 1
    %p137 = scmp.eq.s32.totalorder %s15, 7
    %p138 = scmp.ne.s32.totalorder %s133, %s135
    %p139 = scmp.eq.s32.totalorder %s15, 0
    %p140 = por %p138, %p139
    %p141 = scmp.ne.s32.totalorder %s133, %s135
    %p142 = scmp.eq.s32.totalorder %s20, 7
    %p143 = por %p141, %p142
    %p144 = scmp.ne.s32.totalorder %s135, %s136
    %p145 = scmp.eq.s32.totalorder %s20, 0
    %p146 = por %p144, %p145
    %p147 = scmp.ne.s32.totalorder %s135, %s136
    %p148 = scmp.eq.s32.totalorder %s21, 7
    %p149 = por %p147, %p148
    %p151 = scmp.ne.s32.totalorder %s136, %s150
    %p152 = scmp.eq.s32.totalorder %s21, 0
    %p153 = por %p151, %p152
    %s155 = sadd.s32 %s154, 1
    %p158 = scmp.eq.s32.totalorder %s15, 7
    %p159 = scmp.ne.s32.totalorder %s154, %s156
    %p160 = scmp.eq.s32.totalorder %s15, 0
    %p161 = por %p159, %p160
    %p162 = scmp.ne.s32.totalorder %s154, %s156
    %p163 = scmp.eq.s32.totalorder %s20, 7
    %p164 = por %p162, %p163
    %p165 = scmp.ne.s32.totalorder %s156, %s157
    %p166 = scmp.eq.s32.totalorder %s20, 0
    %p167 = por %p165, %p166
    %p168 = scmp.ne.s32.totalorder %s156, %s157
    %p169 = scmp.eq.s32.totalorder %s21, 7
    %p170 = por %p168, %p169
    %p172 = scmp.ne.s32.totalorder %s157, %s171
    %p173 = scmp.eq.s32.totalorder %s21, 0
    %p174 = por %p172, %p173
    %s176 = sadd.s32 %s175, 1
    %p179 = scmp.eq.s32.totalorder %s15, 7
    %p180 = scmp.ne.s32.totalorder %s175, %s177
    %p181 = scmp.eq.s32.totalorder %s15, 0
    %p182 = por %p180, %p181
    %p183 = scmp.ne.s32.totalorder %s175, %s177
    %p184 = scmp.eq.s32.totalorder %s20, 7
    %p185 = por %p183, %p184
    %p186 = scmp.ne.s32.totalorder %s177, %s178
    %p187 = scmp.eq.s32.totalorder %s20, 0
    %p188 = por %p186, %p187
    %p189 = scmp.ne.s32.totalorder %s177, %s178
    %p190 = scmp.eq.s32.totalorder %s21, 7
    %p191 = por %p189, %p190
    %p193 = scmp.ne.s32.totalorder %s178, %s192
    %p194 = scmp.eq.s32.totalorder %s21, 0
    %p195 = por %p193, %p194
    %s197 = sadd.s32 %s196, 1
    %p200 = scmp.eq.s32.totalorder %s15, 7
    %p201 = scmp.ne.s32.totalorder %s196, %s198
    %p202 = scmp.eq.s32.totalorder %s15, 0
    %p203 = por %p201, %p202
    %p204 = scmp.ne.s32.totalorder %s196, %s198
    %p205 = scmp.eq.s32.totalorder %s20, 7
    %p206 = por %p204, %p205
    %p207 = scmp.ne.s32.totalorder %s198, %s199
    %p208 = scmp.eq.s32.totalorder %s20, 0
    %p209 = por %p207, %p208
    %p210 = scmp.ne.s32.totalorder %s198, %s199
    %p211 = scmp.eq.s32.totalorder %s21, 7
    %p212 = por %p210, %p211
    %p214 = scmp.ne.s32.totalorder %s199, %s213
    %p215 = scmp.eq.s32.totalorder %s21, 0
    %p216 = por %p214, %p215
    %p217 = scmp.le.s32.totalorder 1, %s15
    %p218 = scmp.lt.s32.totalorder %s15, 9
    %p219 = pnand %p217, %p218
    %p220 = pneg %p219
    // Predicated region
    $region9: #{seq2seq_forward.3} parent=5 // pred_check
      _
    $region10: #{seq2seq_forward.3} parent=5 // pred_check_branch
      %222 = sbr.rel (%p219) target = $region12
    $region11: #{seq2seq_forward.3} parent=5 // pred_region
      %s223 = ssub.s32 %s15, 1
      // Predicated region
      $region13: #{seq2seq_forward.3} parent=11 // pred_check
        %p224 = pneg %p62
      $region14: #{seq2seq_forward.3} parent=11 // pred_check_branch
        %226 = sbr.rel (%p224) target = $region16
      $region15: #{seq2seq_forward.3} parent=11 // pred_region
        _
      $region16: #{seq2seq_forward.3} parent=11 // pred_fallthru
        _
      // Predicated region
      $region17: #{seq2seq_forward.3} parent=11 // pred_check
        %p227 = pneg %p83
      $region18: #{seq2seq_forward.3} parent=11 // pred_check_branch
        %229 = sbr.rel (%p227) target = $region20
      $region19: #{seq2seq_forward.3} parent=11 // pred_region
        _
      $region20: #{seq2seq_forward.3} parent=11 // pred_fallthru
        _
      // Predicated region
      $region21: #{seq2seq_forward.3} parent=11 // pred_check
        %p230 = pneg %p104
      $region22: #{seq2seq_forward.3} parent=11 // pred_check_branch
        %232 = sbr.rel (%p230) target = $region24
      $region23: #{seq2seq_forward.3} parent=11 // pred_region
        _
      $region24: #{seq2seq_forward.3} parent=11 // pred_fallthru
        _
      // Predicated region
      $region25: #{seq2seq_forward.3} parent=11 // pred_check
        %p233 = pneg %p125
      $region26: #{seq2seq_forward.3} parent=11 // pred_check_branch
        %235 = sbr.rel (%p233) target = $region28
      $region27: #{seq2seq_forward.3} parent=11 // pred_region
        _
      $region28: #{seq2seq_forward.3} parent=11 // pred_fallthru
        _
      // Predicated region
      $region29: #{seq2seq_forward.3} parent=11 // pred_check
        %p236 = pneg %p146
      $region30: #{seq2seq_forward.3} parent=11 // pred_check_branch
        %238 = sbr.rel (%p236) target = $region32
      $region31: #{seq2seq_forward.3} parent=11 // pred_region
        _
      $region32: #{seq2seq_forward.3} parent=11 // pred_fallthru
        _
      // Predicated region
      $region33: #{seq2seq_forward.3} parent=11 // pred_check
        %p239 = pneg %p167
      $region34: #{seq2seq_forward.3} parent=11 // pred_check_branch
        %241 = sbr.rel (%p239) target = $region36
      $region35: #{seq2seq_forward.3} parent=11 // pred_region
        _
      $region36: #{seq2seq_forward.3} parent=11 // pred_fallthru
        _
    $region12: #{seq2seq_forward.3} parent=5 // pred_fallthru
      _
    %p242 = scmp.lt.s32.totalorder %s15, 8
    // Predicated region
    $region37: #{seq2seq_forward.3} parent=5 // pred_check
      %p243 = pneg %p242
    $region38: #{seq2seq_forward.3} parent=5 // pred_check_branch
      %245 = sbr.rel (%p243) target = $region40
    $region39: #{seq2seq_forward.3} parent=5 // pred_region
      // Predicated region
      $region41: #{seq2seq_forward.3} parent=39 // pred_check
        %p246 = pneg %p35
      $region42: #{seq2seq_forward.3} parent=39 // pred_check_branch
        %248 = sbr.rel (%p246) target = $region44
      $region43: #{seq2seq_forward.3} parent=39 // pred_region
        %p249 = scmp.lt.s32.totalorder %s15, 7
        %s250 = scalar_select %p249, %s15, 7
        %s251 = smul.addr %s250, 8
        %s252 = scalar_lea.vmem %s0, %s251
      $region44: #{seq2seq_forward.3} parent=39 // pred_fallthru
        _
    $region40: #{seq2seq_forward.3} parent=5 // pred_fallthru
      _
    %p253 = scmp.le.s32.totalorder 1, %s15
    %p254 = scmp.lt.s32.totalorder %s15, 9
    %p255 = pnand %p253, %p254
    %p256 = pneg %p255
    // Predicated region
    $region45: #{seq2seq_forward.3} parent=5 // pred_check
      _
    $region46: #{seq2seq_forward.3} parent=5 // pred_check_branch
      %258 = sbr.rel (%p255) target = $region48
    $region47: #{seq2seq_forward.3} parent=5 // pred_region
      %s259 = ssub.s32 %s15, 1
      %p260 = scmp.lt.s32.totalorder %s20, 7
      %s261 = scalar_select %p260, %s20, 7
      %s262 = smul.addr %s261, 8
      %s263 = scalar_lea.vmem %s0, %s262
      %p264 = pneg %p41
      %p265 = pneg %p38
      %p266 = pneg %p62
      %p267 = pneg %p59
      %p268 = pneg %p83
      %p269 = pneg %p80
      %p270 = pneg %p104
      %p271 = pneg %p101
      %p272 = pneg %p125
      %p273 = pneg %p122
      %p274 = pneg %p146
      %p275 = pneg %p143
      %p276 = pneg %p167
      %p277 = pneg %p164
      %p278 = pneg %p188
      %p279 = pneg %p185
      %p280 = pneg %p209
      %p281 = pneg %p206
      %p282 = scmp.lt.s32.totalorder %s20, 7
      %s283 = scalar_select %p282, %s20, 7
      %s284 = smul.addr %s283, 8
      %s285 = scalar_lea.vmem %s0, %s284
      %p286 = scmp.eq.s32.totalorder %s20, 0
      // Predicated region
      $region49: #{seq2seq_forward.3} parent=47 // pred_check
        %p287 = pneg %p286
      $region50: #{seq2seq_forward.3} parent=47 // pred_check_branch
        %289 = sbr.rel (%p287) target = $region52
      $region51: #{seq2seq_forward.3} parent=47 // pred_region
        %vm290 = vcmask 261120
        %291 = vst.msk [vmem:[#allocation2] sm:$0xff] %vm290, 0.0
        %292 = vst.msk [vmem:[#allocation2 + $0x8] sm:$0xff] %vm290, 0.0
        %293 = vst.msk [vmem:[#allocation3] sm:$0xff] %vm290, 0.0
        %294 = vst.msk [vmem:[#allocation3 + $0x8] sm:$0xff] %vm290, 0.0
      $region52: #{seq2seq_forward.3} parent=47 // pred_fallthru
        _
      %v295 = vld [vmem:[%s285] sm:$0xff]
      %v296 = vld [vmem:[#allocation2] sm:$0xff]
      %v297 = vld [vmem:[#allocation3] sm:$0xff]
      %v298 = vld [vmem:[%s1] sm:$0xff]
      %v299 = vld [vmem:[%s1 + $0x8] sm:$0xff]
      %v300 = vld [vmem:[%s3] sm:$0xff]
      %v301 = vld [vmem:[%s3 + $0x8] sm:$0xff]
      %v302 = vld [vmem:[%s3 + $0x10] sm:$0xff]
      %v303 = vld [vmem:[%s3 + $0x18] sm:$0xff]
      %vm304 = vcmask 261120
      %v306 = vsel %vm304, %v296, 0
      %308 = vmatpush.msra.mxu0 0.0
      %309 = vmatpush.msra.mxu0 0.0
      %310 = vmatpush.msra.mxu0 0.0
      %311 = vmatpush.msra.mxu0 0.0
      %312 = vmatpush.msra.mxu0 0.0
      %313 = vmatpush.msra.mxu0 0.0
      %314 = vmatpush.msra.mxu0 0.0
      %315 = vmatpush.msra.mxu0 0.0
      %316 = vmatpush.msra.mxu0 0.0
      %317 = vmatpush.msra.mxu0 0.0
      %318 = vmatpush.msra.mxu0 0.0
      %319 = vmatpush.msra.mxu0 0.0
      %320 = vmatpush.msra.mxu0 %v303
      %321 = vmatpush.msra.mxu0 %v302
      %322 = vmatpush.msra.mxu0 %v301
      %323 = vmatpush.msra.mxu0 %v300
      %324 = vmatmul.f32.gmra.mxu0 %v306
      %v325 = vpop.f32.mrf.mxu0
      %v326 = vadd.f32 0.0, %v325
      %327 = vdwg.mxu0
      %vm328 = vcmask 130048
      %v330 = vsel %vm328, %v295, 0
      %332 = vmatpush.msra.mxu0 0.0
      %333 = vmatpush.msra.mxu0 0.0
      %334 = vmatpush.msra.mxu0 0.0
      %335 = vmatpush.msra.mxu0 0.0
      %336 = vmatpush.msra.mxu0 0.0
      %337 = vmatpush.msra.mxu0 0.0
      %338 = vmatpush.msra.mxu0 0.0
      %339 = vmatpush.msra.mxu0 0.0
      %340 = vmatpush.msra.mxu0 0.0
      %341 = vmatpush.msra.mxu0 0.0
      %342 = vmatpush.msra.mxu0 0.0
      %343 = vmatpush.msra.mxu0 0.0
      %344 = vmatpush.msra.mxu0 0.0
      %345 = vmatpush.msra.mxu0 0.0
      %346 = vmatpush.msra.mxu0 %v299
      %347 = vmatpush.msra.mxu0 %v298
      %348 = vmatmul.f32.gmra.mxu0 %v330
      %v349 = vpop.f32.mrf.mxu0
      %v350 = vadd.f32 %v326, %v349
      %351 = vdwg.mxu0
      %v352 = vld [vmem:[%s5] sm:$0x1]
      %v354 = vperm.slane %v352, 0
      %v356 = vadd.f32 %v350, %v354
      %v357 = vxor.u32 %v356, 2147483648
      %v358 = vmul.f32 %v357, 1.442695
      %v359 = vpow.pop %v358
      %v360 = vadd.f32 %v359, 1.0
      %v361 = vrcp.pop %v360
      %v362 = vmul.f32 %v360, %v361
      %v363 = vsub.f32 1.0, %v362
      %v364 = vmul.f32 %v361, %v363
      %v365 = vadd.f32 %v361, %v364
      %vm366 = vweird.f32 %v360
      %vm367 = vweird.f32 %v361
      %vm368 = vmor %vm366, %vm367
      %v369 = vsel %vm368, %v361, %v365
      %v370 = vand.u32 2147483647, %v360
      %vm371 = vcmp.eq.f32.partialorder %v370, 8.507059e+37
      %v372 = vand.u32 %v360, 2147483648
      %v373 = vor.u32 1.1754944e-38, %v372
      %v374 = vsel %vm371, %v373, %v369
      %v375 = vmul.f32 1.0, %v374
      %v376 = vtanh.pop %v356
      %378 = vrot.lane.b32.xlu0 %v297, 32
      %v379 = vpop.permute.xlu0 %378
      %v381 = vmul.f32 %v375, %v379
      %383 = vrot.lane.b32.xlu0 %v376, 64
      %v384 = vpop.permute.xlu0 %383
      %v386 = vmul.f32 %v375, %v384
      %388 = vrot.lane.b32.xlu0 %v386, 32
      %v389 = vpop.permute.xlu0 %388
      %v391 = vadd.f32 %v381, %v389
      %v392 = vtanh.pop %v391
      %394 = vrot.lane.b32.xlu0 %v392, 64
      %v395 = vpop.permute.xlu0 %394
      %v397 = vmul.f32 %v375, %v395
      %399 = vrot.lane.b32.xlu0 %v397, 32
      %v400 = vpop.permute.xlu0 %399
      %402 = vst.msk [vmem:[#allocation2] sm:$0xff] %vm304, %v400
      %404 = vrot.lane.b32.xlu0 %v391, 96
      %v405 = vpop.permute.xlu0 %404
      %407 = vst.msk [vmem:[#allocation3] sm:$0xff] %vm304, %v405
      %s408 = scalar_lea.vmem [#allocation2], 8
      %v409 = vld [vmem:[%s408] sm:$0xff]
      %s410 = scalar_lea.vmem [#allocation3], 8
      %v411 = vld [vmem:[%s410] sm:$0xff]
      %v412 = vld [vmem:[%s2] sm:$0xff]
      %v413 = vld [vmem:[%s2 + $0x8] sm:$0xff]
      %v414 = vld [vmem:[%s2 + $0x10] sm:$0xff]
      %v415 = vld [vmem:[%s2 + $0x18] sm:$0xff]
      %v416 = vld [vmem:[%s4] sm:$0xff]
      %v417 = vld [vmem:[%s4 + $0x8] sm:$0xff]
      %v418 = vld [vmem:[%s4 + $0x10] sm:$0xff]
      %v419 = vld [vmem:[%s4 + $0x18] sm:$0xff]
      %v421 = vsel %vm304, %v409, 0
      %423 = vmatpush.msra.mxu0 0.0
      %424 = vmatpush.msra.mxu0 0.0
      %425 = vmatpush.msra.mxu0 0.0
      %426 = vmatpush.msra.mxu0 0.0
      %427 = vmatpush.msra.mxu0 0.0
      %428 = vmatpush.msra.mxu0 0.0
      %429 = vmatpush.msra.mxu0 0.0
      %430 = vmatpush.msra.mxu0 0.0
      %431 = vmatpush.msra.mxu0 0.0
      %432 = vmatpush.msra.mxu0 0.0
      %433 = vmatpush.msra.mxu0 0.0
      %434 = vmatpush.msra.mxu0 0.0
      %435 = vmatpush.msra.mxu0 %v419
      %436 = vmatpush.msra.mxu0 %v418
      %437 = vmatpush.msra.mxu0 %v417
      %438 = vmatpush.msra.mxu0 %v416
      %439 = vmatmul.f32.gmra.mxu0 %v421
      %v440 = vpop.f32.mrf.mxu0
      %v441 = vadd.f32 0.0, %v440
      %442 = vdwg.mxu0
      %v443 = vsel %vm304, %v400, 0
      %445 = vmatpush.msra.mxu0 0.0
      %446 = vmatpush.msra.mxu0 0.0
      %447 = vmatpush.msra.mxu0 0.0
      %448 = vmatpush.msra.mxu0 0.0
      %449 = vmatpush.msra.mxu0 0.0
      %450 = vmatpush.msra.mxu0 0.0
      %451 = vmatpush.msra.mxu0 0.0
      %452 = vmatpush.msra.mxu0 0.0
      %453 = vmatpush.msra.mxu0 0.0
      %454 = vmatpush.msra.mxu0 0.0
      %455 = vmatpush.msra.mxu0 0.0
      %456 = vmatpush.msra.mxu0 0.0
      %457 = vmatpush.msra.mxu0 %v415
      %458 = vmatpush.msra.mxu0 %v414
      %459 = vmatpush.msra.mxu0 %v413
      %460 = vmatpush.msra.mxu0 %v412
      %461 = vmatmul.f32.gmra.mxu0 %v443
      %v462 = vpop.f32.mrf.mxu0
      %v463 = vadd.f32 %v441, %v462
      %464 = vdwg.mxu0
      %v465 = vld [vmem:[%s6] sm:$0x1]
      %v467 = vperm.slane %v465, 0
      %v469 = vadd.f32 %v463, %v467
      %v470 = vxor.u32 %v469, 2147483648
      %v471 = vmul.f32 %v470, 1.442695
      %v472 = vpow.pop %v471
      %v473 = vadd.f32 %v472, 1.0
      %v474 = vrcp.pop %v473
      %v475 = vmul.f32 %v473, %v474
      %v476 = vsub.f32 1.0, %v475
      %v477 = vmul.f32 %v474, %v476
      %v478 = vadd.f32 %v474, %v477
      %vm479 = vweird.f32 %v473
      %vm480 = vweird.f32 %v474
      %vm481 = vmor %vm479, %vm480
      %v482 = vsel %vm481, %v474, %v478
      %v483 = vand.u32 2147483647, %v473
      %vm484 = vcmp.eq.f32.partialorder %v483, 8.507059e+37
      %v485 = vand.u32 %v473, 2147483648
      %v486 = vor.u32 1.1754944e-38, %v485
      %v487 = vsel %vm484, %v486, %v482
      %v488 = vmul.f32 1.0, %v487
      %v489 = vtanh.pop %v469
      %491 = vrot.lane.b32.xlu0 %v411, 32
      %v492 = vpop.permute.xlu0 %491
      %v494 = vmul.f32 %v488, %v492
      %496 = vrot.lane.b32.xlu0 %v489, 64
      %v497 = vpop.permute.xlu0 %496
      %v499 = vmul.f32 %v488, %v497
      %501 = vrot.lane.b32.xlu0 %v499, 32
      %v502 = vpop.permute.xlu0 %501
      %v504 = vadd.f32 %v494, %v502
      %v505 = vtanh.pop %v504
      %507 = vrot.lane.b32.xlu0 %v505, 64
      %v508 = vpop.permute.xlu0 %507
      %v510 = vmul.f32 %v488, %v508
      %512 = vrot.lane.b32.xlu0 %v510, 32
      %v513 = vpop.permute.xlu0 %512
      %515 = vst.msk [vmem:[%s408] sm:$0xff] %vm304, %v513
      %517 = vrot.lane.b32.xlu0 %v504, 96
      %v518 = vpop.permute.xlu0 %517
      %520 = vst.msk [vmem:[%s410] sm:$0xff] %vm304, %v518
      %p521 = scmp.eq.s32.totalorder %s20, 7
      // Predicated region
      $region53: #{seq2seq_forward.3} parent=47 // pred_check
        %p522 = pneg %p521
      $region54: #{seq2seq_forward.3} parent=47 // pred_check_branch
        %524 = sbr.rel (%p522) target = $region56
      $region55: #{seq2seq_forward.3} parent=47 // pred_region
        %v525 = vld [vmem:[#allocation2] sm:$0xff]
        %v526 = vld [vmem:[#allocation2 + $0x8] sm:$0xff]
        %527 = vst.msk [vmem:[%s7] sm:$0xff] %vm304, %v525
        %528 = vst.msk [vmem:[%s7 + $0x8] sm:$0xff] %vm304, %v526
        %v529 = vld [vmem:[#allocation3] sm:$0xff]
        %v530 = vld [vmem:[#allocation3 + $0x8] sm:$0xff]
        %531 = vst.msk [vmem:[%s8] sm:$0xff] %vm304, %v529
        %532 = vst.msk [vmem:[%s8 + $0x8] sm:$0xff] %vm304, %v530
      $region56: #{seq2seq_forward.3} parent=47 // pred_fallthru
        _
      // Predicated region
      $region57: #{seq2seq_forward.3} parent=47 // pred_check
        %p533 = pneg %p185
      $region58: #{seq2seq_forward.3} parent=47 // pred_check_branch
        %535 = sbr.rel (%p533) target = $region60
      $region59: #{seq2seq_forward.3} parent=47 // pred_region
        _
      $region60: #{seq2seq_forward.3} parent=47 // pred_fallthru
        _
      // Predicated region
      $region61: #{seq2seq_forward.3} parent=47 // pred_check
        %p536 = pneg %p206
      $region62: #{seq2seq_forward.3} parent=47 // pred_check_branch
        %538 = sbr.rel (%p536) target = $region64
      $region63: #{seq2seq_forward.3} parent=47 // pred_region
        _
      $region64: #{seq2seq_forward.3} parent=47 // pred_fallthru
        _
      // Predicated region
      $region65: #{seq2seq_forward.3} parent=47 // pred_check
        %p539 = pneg %p185
      $region66: #{seq2seq_forward.3} parent=47 // pred_check_branch
        %541 = sbr.rel (%p539) target = $region68
      $region67: #{seq2seq_forward.3} parent=47 // pred_region
        _
      $region68: #{seq2seq_forward.3} parent=47 // pred_fallthru
        _
      // Predicated region
      $region69: #{seq2seq_forward.3} parent=47 // pred_check
        %p542 = pneg %p206
      $region70: #{seq2seq_forward.3} parent=47 // pred_check_branch
        %544 = sbr.rel (%p542) target = $region72
      $region71: #{seq2seq_forward.3} parent=47 // pred_region
        _
      $region72: #{seq2seq_forward.3} parent=47 // pred_fallthru
        _
    $region48: #{seq2seq_forward.3} parent=5 // pred_fallthru
      _
    %p545 = scmp.le.s32.totalorder 2, %s15
    // Predicated region
    $region73: #{seq2seq_forward.3} parent=5 // pred_check
      %p546 = pneg %p545
    $region74: #{seq2seq_forward.3} parent=5 // pred_check_branch
      %548 = sbr.rel (%p546) target = $region76
    $region75: #{seq2seq_forward.3} parent=5 // pred_region
      %s549 = ssub.s32 %s15, 2
    $region76: #{seq2seq_forward.3} parent=5 // pred_fallthru
      _
  $region6: #{seq2seq_forward.3} parent=0 // loop_footer
    %s19 = sadd.s32 1, %s15
  $region7: #{seq2seq_forward.3} parent=0 // loop_footer_branch
    %14 = sbr.rel target = $region3
  $region8: #{seq2seq_forward.3} parent=0 // loop_exit
    _

// kernel: seq2seq_forward.4
$region0: #{seq2seq_forward.4}
  #allocation0 [shape = 'u32[]', space=smem, size = 0x4, offset = 0x4, fixed_abs, tag = 'smem constant byte address 0x4 - core index']
  #allocation1 [shape = 'u32[72,128]{1,0:T(1,128)}', space=vmem, size = 0x9000, scoped, tag = 'internal scratch']
  #allocation2 [shape = 'f32[2,8,32]{2,1,0:T(8,128)}', space=vmem, size = 0x2000, scoped, tag = 'scratch operand']
  #allocation3 [shape = 'f32[2,8,32]{2,1,0:T(8,128)}', space=vmem, size = 0x2000, scoped, tag = 'scratch operand']
  %s0 = inlined_call_operand.vmem [shape: f32[7,8,16], index: 0, kind: input, shape index: {}]
  %s1 = inlined_call_operand.vmem [shape: f32[2,8,32], index: 1, kind: input, shape index: {}]
  %s2 = inlined_call_operand.vmem [shape: f32[2,8,32], index: 2, kind: input, shape index: {}]
  %s3 = inlined_call_operand.vmem [shape: f32[16,128], index: 3, kind: input, shape index: {}]
  %s4 = inlined_call_operand.vmem [shape: f32[32,128], index: 4, kind: input, shape index: {}]
  %s5 = inlined_call_operand.vmem [shape: f32[32,128], index: 5, kind: input, shape index: {}]
  %s6 = inlined_call_operand.vmem [shape: f32[32,128], index: 6, kind: input, shape index: {}]
  %s7 = inlined_call_operand.vmem [shape: f32[1,128], index: 7, kind: input, shape index: {}]
  %s8 = inlined_call_operand.vmem [shape: f32[1,128], index: 8, kind: input, shape index: {}]
  %s9 = inlined_call_operand.vmem [shape: f32[7,8,32], index: 9, kind: output, shape index: {}]
  %s10 = sld [smem:[#allocation0]]
  $region73: #{seq2seq_forward.4} parent=0
    _
  %s12 = ssub.s32 1, %s10
  %s13 = scalar_select 0, %s12, %s10
  loop: start=0, step=1, limit=9
  $region2: #{seq2seq_forward.4} parent=0 // loop_pre_header
    _
  $region3: #{seq2seq_forward.4} parent=0 // loop_header
    %s15 = sphi 0, %s19
    %p16 = scmp.ge.s32.totalorder %s15, 9
    %s25 = sphi 0, %s27
    %s28 = sphi 0, %s25
    %s29 = sphi 0, %s28
    %s45 = sphi 0, %s29
    %s49 = sphi 0, %s49
    %s51 = sphi 0, %s49
    %s52 = sphi 0, %s51
    %s66 = sphi 0, %s52
    %s70 = sphi 0, %s70
    %s72 = sphi 0, %s70
    %s73 = sphi 0, %s72
    %s87 = sphi 0, %s73
    %s91 = sphi 0, %s91
    %s93 = sphi 0, %s91
    %s94 = sphi 0, %s93
    %s108 = sphi 0, %s94
    %s112 = sphi 0, %s112
    %s114 = sphi 0, %s112
    %s115 = sphi 0, %s114
    %s129 = sphi 0, %s115
    %s133 = sphi 0, %s133
    %s135 = sphi 0, %s133
    %s136 = sphi 0, %s135
    %s150 = sphi 0, %s136
    %s154 = sphi 0, %s154
    %s156 = sphi 0, %s154
    %s157 = sphi 0, %s156
    %s171 = sphi 0, %s157
    %s175 = sphi 0, %s175
    %s177 = sphi 0, %s175
    %s178 = sphi 0, %s177
    %s192 = sphi 0, %s178
    %s196 = sphi 0, %s196
    %s198 = sphi 0, %s196
    %s199 = sphi 0, %s198
    %s213 = sphi 0, %s199
    %s219 = sphi 0, %s221
    %s222 = sphi 0, %s219
    %s223 = sphi 0, %s222
    %s239 = sphi 0, %s223
  $region4: #{seq2seq_forward.4} parent=0 // loop_header_branch
    %18 = sbr.rel (%p16) target = $region8
  $region5: #{seq2seq_forward.4} parent=0 // loop_body
    %s20 = ssub.s32 %s15, 1
    %s21 = ssub.s32 %s15, 2
    %s22 = sadd.s32 %s15, 1
    %s23 = ssub.s32 %s15, %s22
    %p24 = scmp.eq.s32.totalorder %s23, 0
    %s26 = sadd.s32 %s25, 1
    %s27 = scalar_select %p24, %s25, %s26
    %p30 = pneg %p24
    %p31 = scmp.eq.s32.totalorder %s15, 6
    %p32 = por %p30, %p31
    %p33 = scmp.ne.s32.totalorder %s25, %s28
    %p34 = scmp.eq.s32.totalorder %s15, 0
    %p35 = por %p33, %p34
    %p36 = scmp.ne.s32.totalorder %s25, %s28
    %p37 = scmp.eq.s32.totalorder %s20, 6
    %p38 = por %p36, %p37
    %p39 = scmp.ne.s32.totalorder %s28, %s29
    %p40 = scmp.eq.s32.totalorder %s20, 0
    %p41 = por %p39, %p40
    %p42 = scmp.ne.s32.totalorder %s28, %s29
    %p43 = scmp.eq.s32.totalorder %s21, 6
    %p44 = por %p42, %p43
    %p46 = scmp.ne.s32.totalorder %s29, %s45
    %p47 = scmp.eq.s32.totalorder %s21, 0
    %p48 = por %p46, %p47
    %s50 = sadd.s32 %s49, 1
    %p53 = scmp.eq.s32.totalorder %s15, 6
    %p54 = scmp.ne.s32.totalorder %s49, %s51
    %p55 = scmp.eq.s32.totalorder %s15, 0
    %p56 = por %p54, %p55
    %p57 = scmp.ne.s32.totalorder %s49, %s51
    %p58 = scmp.eq.s32.totalorder %s20, 6
    %p59 = por %p57, %p58
    %p60 = scmp.ne.s32.totalorder %s51, %s52
    %p61 = scmp.eq.s32.totalorder %s20, 0
    %p62 = por %p60, %p61
    %p63 = scmp.ne.s32.totalorder %s51, %s52
    %p64 = scmp.eq.s32.totalorder %s21, 6
    %p65 = por %p63, %p64
    %p67 = scmp.ne.s32.totalorder %s52, %s66
    %p68 = scmp.eq.s32.totalorder %s21, 0
    %p69 = por %p67, %p68
    %s71 = sadd.s32 %s70, 1
    %p74 = scmp.eq.s32.totalorder %s15, 6
    %p75 = scmp.ne.s32.totalorder %s70, %s72
    %p76 = scmp.eq.s32.totalorder %s15, 0
    %p77 = por %p75, %p76
    %p78 = scmp.ne.s32.totalorder %s70, %s72
    %p79 = scmp.eq.s32.totalorder %s20, 6
    %p80 = por %p78, %p79
    %p81 = scmp.ne.s32.totalorder %s72, %s73
    %p82 = scmp.eq.s32.totalorder %s20, 0
    %p83 = por %p81, %p82
    %p84 = scmp.ne.s32.totalorder %s72, %s73
    %p85 = scmp.eq.s32.totalorder %s21, 6
    %p86 = por %p84, %p85
    %p88 = scmp.ne.s32.totalorder %s73, %s87
    %p89 = scmp.eq.s32.totalorder %s21, 0
    %p90 = por %p88, %p89
    %s92 = sadd.s32 %s91, 1
    %p95 = scmp.eq.s32.totalorder %s15, 6
    %p96 = scmp.ne.s32.totalorder %s91, %s93
    %p97 = scmp.eq.s32.totalorder %s15, 0
    %p98 = por %p96, %p97
    %p99 = scmp.ne.s32.totalorder %s91, %s93
    %p100 = scmp.eq.s32.totalorder %s20, 6
    %p101 = por %p99, %p100
    %p102 = scmp.ne.s32.totalorder %s93, %s94
    %p103 = scmp.eq.s32.totalorder %s20, 0
    %p104 = por %p102, %p103
    %p105 = scmp.ne.s32.totalorder %s93, %s94
    %p106 = scmp.eq.s32.totalorder %s21, 6
    %p107 = por %p105, %p106
    %p109 = scmp.ne.s32.totalorder %s94, %s108
    %p110 = scmp.eq.s32.totalorder %s21, 0
    %p111 = por %p109, %p110
    %s113 = sadd.s32 %s112, 1
    %p116 = scmp.eq.s32.totalorder %s15, 6
    %p117 = scmp.ne.s32.totalorder %s112, %s114
    %p118 = scmp.eq.s32.totalorder %s15, 0
    %p119 = por %p117, %p118
    %p120 = scmp.ne.s32.totalorder %s112, %s114
    %p121 = scmp.eq.s32.totalorder %s20, 6
    %p122 = por %p120, %p121
    %p123 = scmp.ne.s32.totalorder %s114, %s115
    %p124 = scmp.eq.s32.totalorder %s20, 0
    %p125 = por %p123, %p124
    %p126 = scmp.ne.s32.totalorder %s114, %s115
    %p127 = scmp.eq.s32.totalorder %s21, 6
    %p128 = por %p126, %p127
    %p130 = scmp.ne.s32.totalorder %s115, %s129
    %p131 = scmp.eq.s32.totalorder %s21, 0
    %p132 = por %p130, %p131
    %s134 = sadd.s32 %s133, 1
    %p137 = scmp.eq.s32.totalorder %s15, 6
    %p138 = scmp.ne.s32.totalorder %s133, %s135
    %p139 = scmp.eq.s32.totalorder %s15, 0
    %p140 = por %p138, %p139
    %p141 = scmp.ne.s32.totalorder %s133, %s135
    %p142 = scmp.eq.s32.totalorder %s20, 6
    %p143 = por %p141, %p142
    %p144 = scmp.ne.s32.totalorder %s135, %s136
    %p145 = scmp.eq.s32.totalorder %s20, 0
    %p146 = por %p144, %p145
    %p147 = scmp.ne.s32.totalorder %s135, %s136
    %p148 = scmp.eq.s32.totalorder %s21, 6
    %p149 = por %p147, %p148
    %p151 = scmp.ne.s32.totalorder %s136, %s150
    %p152 = scmp.eq.s32.totalorder %s21, 0
    %p153 = por %p151, %p152
    %s155 = sadd.s32 %s154, 1
    %p158 = scmp.eq.s32.totalorder %s15, 6
    %p159 = scmp.ne.s32.totalorder %s154, %s156
    %p160 = scmp.eq.s32.totalorder %s15, 0
    %p161 = por %p159, %p160
    %p162 = scmp.ne.s32.totalorder %s154, %s156
    %p163 = scmp.eq.s32.totalorder %s20, 6
    %p164 = por %p162, %p163
    %p165 = scmp.ne.s32.totalorder %s156, %s157
    %p166 = scmp.eq.s32.totalorder %s20, 0
    %p167 = por %p165, %p166
    %p168 = scmp.ne.s32.totalorder %s156, %s157
    %p169 = scmp.eq.s32.totalorder %s21, 6
    %p170 = por %p168, %p169
    %p172 = scmp.ne.s32.totalorder %s157, %s171
    %p173 = scmp.eq.s32.totalorder %s21, 0
    %p174 = por %p172, %p173
    %s176 = sadd.s32 %s175, 1
    %p179 = scmp.eq.s32.totalorder %s15, 6
    %p180 = scmp.ne.s32.totalorder %s175, %s177
    %p181 = scmp.eq.s32.totalorder %s15, 0
    %p182 = por %p180, %p181
    %p183 = scmp.ne.s32.totalorder %s175, %s177
    %p184 = scmp.eq.s32.totalorder %s20, 6
    %p185 = por %p183, %p184
    %p186 = scmp.ne.s32.totalorder %s177, %s178
    %p187 = scmp.eq.s32.totalorder %s20, 0
    %p188 = por %p186, %p187
    %p189 = scmp.ne.s32.totalorder %s177, %s178
    %p190 = scmp.eq.s32.totalorder %s21, 6
    %p191 = por %p189, %p190
    %p193 = scmp.ne.s32.totalorder %s178, %s192
    %p194 = scmp.eq.s32.totalorder %s21, 0
    %p195 = por %p193, %p194
    %s197 = sadd.s32 %s196, 1
    %p200 = scmp.eq.s32.totalorder %s15, 6
    %p201 = scmp.ne.s32.totalorder %s196, %s198
    %p202 = scmp.eq.s32.totalorder %s15, 0
    %p203 = por %p201, %p202
    %p204 = scmp.ne.s32.totalorder %s196, %s198
    %p205 = scmp.eq.s32.totalorder %s20, 6
    %p206 = por %p204, %p205
    %p207 = scmp.ne.s32.totalorder %s198, %s199
    %p208 = scmp.eq.s32.totalorder %s20, 0
    %p209 = por %p207, %p208
    %p210 = scmp.ne.s32.totalorder %s198, %s199
    %p211 = scmp.eq.s32.totalorder %s21, 6
    %p212 = por %p210, %p211
    %p214 = scmp.ne.s32.totalorder %s199, %s213
    %p215 = scmp.eq.s32.totalorder %s21, 0
    %p216 = por %p214, %p215
    %s217 = ssub.s32 %s15, %s22
    %p218 = scmp.eq.s32.totalorder %s217, 0
    %s220 = sadd.s32 %s219, 1
    %s221 = scalar_select %p218, %s219, %s220
    %p224 = pneg %p218
    %p225 = scmp.eq.s32.totalorder %s15, 6
    %p226 = por %p224, %p225
    %p227 = scmp.ne.s32.totalorder %s219, %s222
    %p228 = scmp.eq.s32.totalorder %s15, 0
    %p229 = por %p227, %p228
    %p230 = scmp.ne.s32.totalorder %s219, %s222
    %p231 = scmp.eq.s32.totalorder %s20, 6
    %p232 = por %p230, %p231
    %p233 = scmp.ne.s32.totalorder %s222, %s223
    %p234 = scmp.eq.s32.totalorder %s20, 0
    %p235 = por %p233, %p234
    %p236 = scmp.ne.s32.totalorder %s222, %s223
    %p237 = scmp.eq.s32.totalorder %s21, 6
    %p238 = por %p236, %p237
    %p240 = scmp.ne.s32.totalorder %s223, %s239
    %p241 = scmp.eq.s32.totalorder %s21, 0
    %p242 = por %p240, %p241
    %p243 = scmp.le.s32.totalorder 1, %s15
    %p244 = scmp.lt.s32.totalorder %s15, 8
    %p245 = pnand %p243, %p244
    %p246 = pneg %p245
    // Predicated region
    $region9: #{seq2seq_forward.4} parent=5 // pred_check
      _
    $region10: #{seq2seq_forward.4} parent=5 // pred_check_branch
      %248 = sbr.rel (%p245) target = $region12
    $region11: #{seq2seq_forward.4} parent=5 // pred_region
      %s249 = ssub.s32 %s15, 1
      // Predicated region
      $region13: #{seq2seq_forward.4} parent=11 // pred_check
        %p250 = pneg %p62
      $region14: #{seq2seq_forward.4} parent=11 // pred_check_branch
        %252 = sbr.rel (%p250) target = $region16
      $region15: #{seq2seq_forward.4} parent=11 // pred_region
        _
      $region16: #{seq2seq_forward.4} parent=11 // pred_fallthru
        _
      // Predicated region
      $region17: #{seq2seq_forward.4} parent=11 // pred_check
        %p253 = pneg %p83
      $region18: #{seq2seq_forward.4} parent=11 // pred_check_branch
        %255 = sbr.rel (%p253) target = $region20
      $region19: #{seq2seq_forward.4} parent=11 // pred_region
        _
      $region20: #{seq2seq_forward.4} parent=11 // pred_fallthru
        _
      // Predicated region
      $region21: #{seq2seq_forward.4} parent=11 // pred_check
        %p256 = pneg %p104
      $region22: #{seq2seq_forward.4} parent=11 // pred_check_branch
        %258 = sbr.rel (%p256) target = $region24
      $region23: #{seq2seq_forward.4} parent=11 // pred_region
        _
      $region24: #{seq2seq_forward.4} parent=11 // pred_fallthru
        _
      // Predicated region
      $region25: #{seq2seq_forward.4} parent=11 // pred_check
        %p259 = pneg %p125
      $region26: #{seq2seq_forward.4} parent=11 // pred_check_branch
        %261 = sbr.rel (%p259) target = $region28
      $region27: #{seq2seq_forward.4} parent=11 // pred_region
        _
      $region28: #{seq2seq_forward.4} parent=11 // pred_fallthru
        _
      // Predicated region
      $region29: #{seq2seq_forward.4} parent=11 // pred_check
        %p262 = pneg %p146
      $region30: #{seq2seq_forward.4} parent=11 // pred_check_branch
        %264 = sbr.rel (%p262) target = $region32
      $region31: #{seq2seq_forward.4} parent=11 // pred_region
        _
      $region32: #{seq2seq_forward.4} parent=11 // pred_fallthru
        _
      // Predicated region
      $region33: #{seq2seq_forward.4} parent=11 // pred_check
        %p265 = pneg %p167
      $region34: #{seq2seq_forward.4} parent=11 // pred_check_branch
        %267 = sbr.rel (%p265) target = $region36
      $region35: #{seq2seq_forward.4} parent=11 // pred_region
        _
      $region36: #{seq2seq_forward.4} parent=11 // pred_fallthru
        _
      // Predicated region
      $region37: #{seq2seq_forward.4} parent=11 // pred_check
        %p268 = pneg %p188
      $region38: #{seq2seq_forward.4} parent=11 // pred_check_branch
        %270 = sbr.rel (%p268) target = $region40
      $region39: #{seq2seq_forward.4} parent=11 // pred_region
        _
      $region40: #{seq2seq_forward.4} parent=11 // pred_fallthru
        _
      // Predicated region
      $region41: #{seq2seq_forward.4} parent=11 // pred_check
        %p271 = pneg %p209
      $region42: #{seq2seq_forward.4} parent=11 // pred_check_branch
        %273 = sbr.rel (%p271) target = $region44
      $region43: #{seq2seq_forward.4} parent=11 // pred_region
        _
      $region44: #{seq2seq_forward.4} parent=11 // pred_fallthru
        _
    $region12: #{seq2seq_forward.4} parent=5 // pred_fallthru
      _
    %p274 = scmp.lt.s32.totalorder %s15, 7
    // Predicated region
    $region45: #{seq2seq_forward.4} parent=5 // pred_check
      %p275 = pneg %p274
    $region46: #{seq2seq_forward.4} parent=5 // pred_check_branch
      %277 = sbr.rel (%p275) target = $region48
    $region47: #{seq2seq_forward.4} parent=5 // pred_region
      // Predicated region
      $region49: #{seq2seq_forward.4} parent=47 // pred_check
        %p278 = pneg %p35
      $region50: #{seq2seq_forward.4} parent=47 // pred_check_branch
        %280 = sbr.rel (%p278) target = $region52
      $region51: #{seq2seq_forward.4} parent=47 // pred_region
        %p281 = scmp.lt.s32.totalorder %s15, 6
        %s282 = scalar_select %p281, %s15, 6
        %s283 = smul.addr %s282, 8
        %s284 = scalar_lea.vmem %s0, %s283
      $region52: #{seq2seq_forward.4} parent=47 // pred_fallthru
        _
    $region48: #{seq2seq_forward.4} parent=5 // pred_fallthru
      _
    %p285 = scmp.le.s32.totalorder 1, %s15
    %p286 = scmp.lt.s32.totalorder %s15, 8
    %p287 = pnand %p285, %p286
    %p288 = pneg %p287
    // Predicated region
    $region53: #{seq2seq_forward.4} parent=5 // pred_check
      _
    $region54: #{seq2seq_forward.4} parent=5 // pred_check_branch
      %290 = sbr.rel (%p287) target = $region56
    $region55: #{seq2seq_forward.4} parent=5 // pred_region
      %s291 = ssub.s32 %s15, 1
      %p292 = scmp.lt.s32.totalorder %s20, 6
      %s293 = scalar_select %p292, %s20, 6
      %s294 = smul.addr %s293, 8
      %s295 = scalar_lea.vmem %s0, %s294
      %p296 = pneg %p41
      %p297 = pneg %p38
      %p298 = pneg %p62
      %p299 = pneg %p59
      %p300 = pneg %p83
      %p301 = pneg %p80
      %p302 = pneg %p104
      %p303 = pneg %p101
      %p304 = pneg %p125
      %p305 = pneg %p122
      %p306 = pneg %p146
      %p307 = pneg %p143
      %p308 = pneg %p167
      %p309 = pneg %p164
      %p310 = pneg %p188
      %p311 = pneg %p185
      %p312 = pneg %p209
      %p313 = pneg %p206
      %p314 = pneg %p235
      %p315 = pneg %p232
      %p316 = scmp.lt.s32.totalorder %s20, 6
      %s317 = scalar_select %p316, %s20, 6
      %s318 = smul.addr %s317, 8
      %s319 = scalar_lea.vmem %s9, %s318
      %p320 = scmp.lt.s32.totalorder %s20, 6
      %s321 = scalar_select %p320, %s20, 6
      %s322 = smul.addr %s321, 8
      %s323 = scalar_lea.vmem %s0, %s322
      %p324 = scmp.lt.s32.totalorder %s20, 6
      %s325 = scalar_select %p324, %s20, 6
      %s326 = smul.addr %s325, 8
      %s327 = scalar_lea.vmem %s9, %s326
      %p328 = scmp.eq.s32.totalorder %s20, 0
      // Predicated region
      $region57: #{seq2seq_forward.4} parent=55 // pred_check
        %p329 = pneg %p328
      $region58: #{seq2seq_forward.4} parent=55 // pred_check_branch
        %331 = sbr.rel (%p329) target = $region60
      $region59: #{seq2seq_forward.4} parent=55 // pred_region
        %v332 = vld [vmem:[%s1] sm:$0xff]
        %v333 = vld [vmem:[%s1 + $0x8] sm:$0xff]
        %vm334 = vcmask 261120
        %335 = vst.msk [vmem:[#allocation2] sm:$0xff] %vm334, %v332
        %336 = vst.msk [vmem:[#allocation2 + $0x8] sm:$0xff] %vm334, %v333
        %v337 = vld [vmem:[%s2] sm:$0xff]
        %v338 = vld [vmem:[%s2 + $0x8] sm:$0xff]
        %339 = vst.msk [vmem:[#allocation3] sm:$0xff] %vm334, %v337
        %340 = vst.msk [vmem:[#allocation3 + $0x8] sm:$0xff] %vm334, %v338
      $region60: #{seq2seq_forward.4} parent=55 // pred_fallthru
        _
      %v341 = vld [vmem:[%s323] sm:$0xff]
      %v342 = vld [vmem:[#allocation2] sm:$0xff]
      %v343 = vld [vmem:[#allocation3] sm:$0xff]
      %v344 = vld [vmem:[%s3] sm:$0xff]
      %v345 = vld [vmem:[%s3 + $0x8] sm:$0xff]
      %v346 = vld [vmem:[%s5] sm:$0xff]
      %v347 = vld [vmem:[%s5 + $0x8] sm:$0xff]
      %v348 = vld [vmem:[%s5 + $0x10] sm:$0xff]
      %v349 = vld [vmem:[%s5 + $0x18] sm:$0xff]
      %vm350 = vcmask 261120
      %v352 = vsel %vm350, %v342, 0
      %354 = vmatpush.msra.mxu0 0.0
      %355 = vmatpush.msra.mxu0 0.0
      %356 = vmatpush.msra.mxu0 0.0
      %357 = vmatpush.msra.mxu0 0.0
      %358 = vmatpush.msra.mxu0 0.0
      %359 = vmatpush.msra.mxu0 0.0
      %360 = vmatpush.msra.mxu0 0.0
      %361 = vmatpush.msra.mxu0 0.0
      %362 = vmatpush.msra.mxu0 0.0
      %363 = vmatpush.msra.mxu0 0.0
      %364 = vmatpush.msra.mxu0 0.0
      %365 = vmatpush.msra.mxu0 0.0
      %366 = vmatpush.msra.mxu0 %v349
      %367 = vmatpush.msra.mxu0 %v348
      %368 = vmatpush.msra.mxu0 %v347
      %369 = vmatpush.msra.mxu0 %v346
      %370 = vmatmul.f32.gmra.mxu0 %v352
      %v371 = vpop.f32.mrf.mxu0
      %v372 = vadd.f32 0.0, %v371
      %373 = vdwg.mxu0
      %vm374 = vcmask 130048
      %v376 = vsel %vm374, %v341, 0
      %378 = vmatpush.msra.mxu0 0.0
      %379 = vmatpush.msra.mxu0 0.0
      %380 = vmatpush.msra.mxu0 0.0
      %381 = vmatpush.msra.mxu0 0.0
      %382 = vmatpush.msra.mxu0 0.0
      %383 = vmatpush.msra.mxu0 0.0
      %384 = vmatpush.msra.mxu0 0.0
      %385 = vmatpush.msra.mxu0 0.0
      %386 = vmatpush.msra.mxu0 0.0
      %387 = vmatpush.msra.mxu0 0.0
      %388 = vmatpush.msra.mxu0 0.0
      %389 = vmatpush.msra.mxu0 0.0
      %390 = vmatpush.msra.mxu0 0.0
      %391 = vmatpush.msra.mxu0 0.0
      %392 = vmatpush.msra.mxu0 %v345
      %393 = vmatpush.msra.mxu0 %v344
      %394 = vmatmul.f32.gmra.mxu0 %v376
      %v395 = vpop.f32.mrf.mxu0
      %v396 = vadd.f32 %v372, %v395
      %397 = vdwg.mxu0
      %v398 = vld [vmem:[%s7] sm:$0x1]
      %v400 = vperm.slane %v398, 0
      %v402 = vadd.f32 %v396, %v400
      %v403 = vxor.u32 %v402, 2147483648
      %v404 = vmul.f32 %v403, 1.442695
      %v405 = vpow.pop %v404
      %v406 = vadd.f32 %v405, 1.0
      %v407 = vrcp.pop %v406
      %v408 = vmul.f32 %v406, %v407
      %v409 = vsub.f32 1.0, %v408
      %v410 = vmul.f32 %v407, %v409
      %v411 = vadd.f32 %v407, %v410
      %vm412 = vweird.f32 %v406
      %vm413 = vweird.f32 %v407
      %vm414 = vmor %vm412, %vm413
      %v415 = vsel %vm414, %v407, %v411
      %v416 = vand.u32 2147483647, %v406
      %vm417 = vcmp.eq.f32.partialorder %v416, 8.507059e+37
      %v418 = vand.u32 %v406, 2147483648
      %v419 = vor.u32 1.1754944e-38, %v418
      %v420 = vsel %vm417, %v419, %v415
      %v421 = vmul.f32 1.0, %v420
      %v422 = vtanh.pop %v402
      %424 = vrot.lane.b32.xlu0 %v343, 32
      %v425 = vpop.permute.xlu0 %424
      %v427 = vmul.f32 %v421, %v425
      %429 = vrot.lane.b32.xlu0 %v422, 64
      %v430 = vpop.permute.xlu0 %429
      %v432 = vmul.f32 %v421, %v430
      %434 = vrot.lane.b32.xlu0 %v432, 32
      %v435 = vpop.permute.xlu0 %434
      %v437 = vadd.f32 %v427, %v435
      %v438 = vtanh.pop %v437
      %440 = vrot.lane.b32.xlu0 %v438, 64
      %v441 = vpop.permute.xlu0 %440
      %v443 = vmul.f32 %v421, %v441
      %445 = vrot.lane.b32.xlu0 %v443, 32
      %v446 = vpop.permute.xlu0 %445
      %448 = vst.msk [vmem:[#allocation2] sm:$0xff] %vm350, %v446
      %450 = vrot.lane.b32.xlu0 %v437, 96
      %v451 = vpop.permute.xlu0 %450
      %453 = vst.msk [vmem:[#allocation3] sm:$0xff] %vm350, %v451
      %s454 = scalar_lea.vmem [#allocation2], 8
      %v455 = vld [vmem:[%s454] sm:$0xff]
      %s456 = scalar_lea.vmem [#allocation3], 8
      %v457 = vld [vmem:[%s456] sm:$0xff]
      %v458 = vld [vmem:[%s4] sm:$0xff]
      %v459 = vld [vmem:[%s4 + $0x8] sm:$0xff]
      %v460 = vld [vmem:[%s4 + $0x10] sm:$0xff]
      %v461 = vld [vmem:[%s4 + $0x18] sm:$0xff]
      %v462 = vld [vmem:[%s6] sm:$0xff]
      %v463 = vld [vmem:[%s6 + $0x8] sm:$0xff]
      %v464 = vld [vmem:[%s6 + $0x10] sm:$0xff]
      %v465 = vld [vmem:[%s6 + $0x18] sm:$0xff]
      %v467 = vsel %vm350, %v455, 0
      %469 = vmatpush.msra.mxu0 0.0
      %470 = vmatpush.msra.mxu0 0.0
      %471 = vmatpush.msra.mxu0 0.0
      %472 = vmatpush.msra.mxu0 0.0
      %473 = vmatpush.msra.mxu0 0.0
      %474 = vmatpush.msra.mxu0 0.0
      %475 = vmatpush.msra.mxu0 0.0
      %476 = vmatpush.msra.mxu0 0.0
      %477 = vmatpush.msra.mxu0 0.0
      %478 = vmatpush.msra.mxu0 0.0
      %479 = vmatpush.msra.mxu0 0.0
      %480 = vmatpush.msra.mxu0 0.0
      %481 = vmatpush.msra.mxu0 %v465
      %482 = vmatpush.msra.mxu0 %v464
      %483 = vmatpush.msra.mxu0 %v463
      %484 = vmatpush.msra.mxu0 %v462
      %485 = vmatmul.f32.gmra.mxu0 %v467
      %v486 = vpop.f32.mrf.mxu0
      %v487 = vadd.f32 0.0, %v486
      %488 = vdwg.mxu0
      %v489 = vsel %vm350, %v446, 0
      %491 = vmatpush.msra.mxu0 0.0
      %492 = vmatpush.msra.mxu0 0.0
      %493 = vmatpush.msra.mxu0 0.0
      %494 = vmatpush.msra.mxu0 0.0
      %495 = vmatpush.msra.mxu0 0.0
      %496 = vmatpush.msra.mxu0 0.0
      %497 = vmatpush.msra.mxu0 0.0
      %498 = vmatpush.msra.mxu0 0.0
      %499 = vmatpush.msra.mxu0 0.0
      %500 = vmatpush.msra.mxu0 0.0
      %501 = vmatpush.msra.mxu0 0.0
      %502 = vmatpush.msra.mxu0 0.0
      %503 = vmatpush.msra.mxu0 %v461
      %504 = vmatpush.msra.mxu0 %v460
      %505 = vmatpush.msra.mxu0 %v459
      %506 = vmatpush.msra.mxu0 %v458
      %507 = vmatmul.f32.gmra.mxu0 %v489
      %v508 = vpop.f32.mrf.mxu0
      %v509 = vadd.f32 %v487, %v508
      %510 = vdwg.mxu0
      %v511 = vld [vmem:[%s8] sm:$0x1]
      %v513 = vperm.slane %v511, 0
      %v515 = vadd.f32 %v509, %v513
      %v516 = vxor.u32 %v515, 2147483648
      %v517 = vmul.f32 %v516, 1.442695
      %v518 = vpow.pop %v517
      %v519 = vadd.f32 %v518, 1.0
      %v520 = vrcp.pop %v519
      %v521 = vmul.f32 %v519, %v520
      %v522 = vsub.f32 1.0, %v521
      %v523 = vmul.f32 %v520, %v522
      %v524 = vadd.f32 %v520, %v523
      %vm525 = vweird.f32 %v519
      %vm526 = vweird.f32 %v520
      %vm527 = vmor %vm525, %vm526
      %v528 = vsel %vm527, %v520, %v524
      %v529 = vand.u32 2147483647, %v519
      %vm530 = vcmp.eq.f32.partialorder %v529, 8.507059e+37
      %v531 = vand.u32 %v519, 2147483648
      %v532 = vor.u32 1.1754944e-38, %v531
      %v533 = vsel %vm530, %v532, %v528
      %v534 = vmul.f32 1.0, %v533
      %v535 = vtanh.pop %v515
      %537 = vrot.lane.b32.xlu0 %v457, 32
      %v538 = vpop.permute.xlu0 %537
      %v540 = vmul.f32 %v534, %v538
      %542 = vrot.lane.b32.xlu0 %v535, 64
      %v543 = vpop.permute.xlu0 %542
      %v545 = vmul.f32 %v534, %v543
      %547 = vrot.lane.b32.xlu0 %v545, 32
      %v548 = vpop.permute.xlu0 %547
      %v550 = vadd.f32 %v540, %v548
      %v551 = vtanh.pop %v550
      %553 = vrot.lane.b32.xlu0 %v551, 64
      %v554 = vpop.permute.xlu0 %553
      %v556 = vmul.f32 %v534, %v554
      %558 = vrot.lane.b32.xlu0 %v556, 32
      %v559 = vpop.permute.xlu0 %558
      %561 = vst.msk [vmem:[%s454] sm:$0xff] %vm350, %v559
      %563 = vrot.lane.b32.xlu0 %v550, 96
      %v564 = vpop.permute.xlu0 %563
      %566 = vst.msk [vmem:[%s456] sm:$0xff] %vm350, %v564
      %567 = vst.msk [vmem:[%s327] sm:$0xff] %vm350, %v559
      %p568 = scmp.lt.s32.totalorder %s20, 6
      %s569 = scalar_select %p568, %s20, 6
      %s570 = smul.addr %s569, 8
      %s571 = scalar_lea.vmem %s9, %s570
      // Predicated region
      $region61: #{seq2seq_forward.4} parent=55 // pred_check
        %p572 = pneg %p232
      $region62: #{seq2seq_forward.4} parent=55 // pred_check_branch
        %574 = sbr.rel (%p572) target = $region64
      $region63: #{seq2seq_forward.4} parent=55 // pred_region
        _
      $region64: #{seq2seq_forward.4} parent=55 // pred_fallthru
        _
    $region56: #{seq2seq_forward.4} parent=5 // pred_fallthru
      _
    %p575 = scmp.le.s32.totalorder 2, %s15
    // Predicated region
    $region65: #{seq2seq_forward.4} parent=5 // pred_check
      %p576 = pneg %p575
    $region66: #{seq2seq_forward.4} parent=5 // pred_check_branch
      %578 = sbr.rel (%p576) target = $region68
    $region67: #{seq2seq_forward.4} parent=5 // pred_region
      %s579 = ssub.s32 %s15, 2
      // Predicated region
      $region69: #{seq2seq_forward.4} parent=67 // pred_check
        %p580 = pneg %p238
      $region70: #{seq2seq_forward.4} parent=67 // pred_check_branch
        %582 = sbr.rel (%p580) target = $region72
      $region71: #{seq2seq_forward.4} parent=67 // pred_region
        %p583 = scmp.lt.s32.totalorder %s21, 6
        %s584 = scalar_select %p583, %s21, 6
        %s585 = smul.addr %s584, 8
        %s586 = scalar_lea.vmem %s9, %s585
      $region72: #{seq2seq_forward.4} parent=67 // pred_fallthru
        _
    $region68: #{seq2seq_forward.4} parent=5 // pred_fallthru
      _
  $region6: #{seq2seq_forward.4} parent=0 // loop_footer
    %s19 = sadd.s32 1, %s15
  $region7: #{seq2seq_forward.4} parent=0 // loop_footer_branch
    %14 = sbr.rel target = $region3
  $region8: #{seq2seq_forward.4} parent=0 // loop_exit
    _

</llo_original>
